<compile_context>
chip_gen: v5e
topology: v5e:2x2
jax: 0.10.0
libtpu: 0.0.40
codegen_flags: <defaults>
</compile_context>

<pallas_src>
import functools

import jax
import jax.numpy as jnp
from jax.experimental import pallas as pl
from jax.experimental.pallas import tpu as pltpu


# ---------------------------------------------------------------------------
# Fused Pallas kernel: one grid step == one block of BB images.
# ---------------------------------------------------------------------------
def _trick_fused_kernel(
    xsd_ref,      # (BB, H2, W2, 4*Cin)  f32   space-to-depth padded input
    stem_w_ref,   # (9, Cin, Cstem)      f32
    stem_b_ref,   # (1, Cstem)           f32
    exp_w_ref,    # (Cstem, Cexp)        bf16
    exp_b_ref,    # (1, Cexp)            f32
    dw_w_ref,     # (9, Cexp)            f32
    dw_b_ref,     # (1, Cexp)            f32
    proj_w_ref,   # (Cexp, Cstem)        bf16
    proj_b_ref,   # (1, Cstem)           f32
    fc_w_ref,     # (Cstem, NCLS_PAD)    bf16  (zero-padded classes)
    fc_b_ref,     # (1, NCLS_PAD)        f32   (zero-padded classes)
    out_ref,      # (BB, NCLS_PAD)       f32
    dw_pad_ref,   # VMEM scratch (BB, Ho+2, Wo+2, Cexp) f32  (zero-halo buffer)
    *, bb, ho, wo, cin, c_stem, c_exp,
):
    m = bb * ho * wo

    # ---- Stem: 3x3 stride-2 conv as 9 small MXU dots (one per tap, K=Cin).
    # Space-to-depth channel group q = (row_parity*2 + col_parity).
    xs = xsd_ref[...]                          # (BB, H2, W2, 4*Cin)
    sw = stem_w_ref[...]                       # (9, Cin, Cstem) f32
    stem_acc = jnp.zeros((m, c_stem), jnp.float32)
    for ky in range(3):
        for kx in range(3):
            q = (ky % 2) * 2 + (kx % 2)
            t = ky * 3 + kx
            tap = xs[:, ky // 2:ky // 2 + ho,
                     kx // 2:kx // 2 + wo,
                     q * cin:(q + 1) * cin].reshape(m, cin)   # (M, Cin)
            stem_acc = stem_acc + jnp.dot(
                tap.astype(jnp.bfloat16),
                sw[t].astype(jnp.bfloat16),                   # (Cin, Cstem)
                preferred_element_type=jnp.float32)
    stem = jnp.clip(stem_acc + stem_b_ref[...], 0.0, 6.0)     # (M, Cstem) f32

    # ---- Expand 1x1 (MXU, bf16 operands, f32 accumulation) + ReLU6.
    h = jnp.dot(stem.astype(jnp.bfloat16), exp_w_ref[...],
                preferred_element_type=jnp.float32) + exp_b_ref[...]
    h = jnp.clip(h, 0.0, 6.0)                                  # (M, Cexp) f32

    # ---- Depthwise 3x3, stride 1, pad 1 via zero-halo scratch.
    # Zero only the 4 border strips (the interior is fully overwritten below);
    # re-done every iteration so it stays correct when the batch grid axis is
    # split across TensorCores ("parallel").
    dw_pad_ref[:, 0:1, :, :] = jnp.zeros((bb, 1, wo + 2, c_exp), jnp.float32)
    dw_pad_ref[:, ho + 1:ho + 2, :, :] = jnp.zeros((bb, 1, wo + 2, c_exp),
                                                   jnp.float32)
    dw_pad_ref[:, 1:ho + 1, 0:1, :] = jnp.zeros((bb, ho, 1, c_exp), jnp.float32)
    dw_pad_ref[:, 1:ho + 1, wo + 1:wo + 2, :] = jnp.zeros((bb, ho, 1, c_exp),
                                                          jnp.float32)
    dw_pad_ref[:, 1:ho + 1, 1:wo + 1, :] = h.reshape(bb, ho, wo, c_exp)

    dpad = dw_pad_ref[...]                                     # (BB, Ho+2, Wo+2, Cexp)
    dww = dw_w_ref[...]                                        # (9, Cexp)
    acc = jnp.zeros((bb, ho, wo, c_exp), jnp.float32)
    for dy in range(3):
        for dx in range(3):
            acc = acc + dpad[:, dy:dy + ho, dx:dx + wo, :] * dww[dy * 3 + dx]
    hd = jnp.clip(acc + dw_b_ref[...], 0.0, 6.0).reshape(m, c_exp)

    # ---- Project 1x1 + bias + residual (skip connection), no activation.
    out = (jnp.dot(hd.astype(jnp.bfloat16), proj_w_ref[...],
                   preferred_element_type=jnp.float32)
           + proj_b_ref[...] + stem)                           # (M, Cstem) f32

    # ---- Head: per-image global average pool + one batched classifier dot.
    pooled = jnp.mean(out.reshape(bb, ho * wo, c_stem), axis=1)  # (BB, Cstem)
    logits = (jnp.dot(pooled.astype(jnp.bfloat16), fc_w_ref[...],
                      preferred_element_type=jnp.float32) + fc_b_ref[...])
    out_ref[...] = logits                                        # (BB, NCLS_PAD)


# ---------------------------------------------------------------------------
# Wrapper: layout plumbing only (no heavy compute, no im2col blow-up).
# ---------------------------------------------------------------------------
def trick_model_forward(params, x_nchw, *, block_batch=8):
    # NCHW (PyTorch convention) -> NHWC for TPU.
    x = jnp.transpose(x_nchw, (0, 2, 3, 1)).astype(jnp.float32)
    n, h, w, cin = x.shape
    assert h % 2 == 0 and w % 2 == 0, "stem stride-2 path assumes even H, W"
    ho, wo = h // 2, w // 2
    h2, w2 = ho + 1, wo + 1

    c_stem = params["stem_b"].shape[0]
    c_exp = params["exp_b"].shape[0]
    ncls = params["fc_b"].shape[0]
    ncls_pad = ((ncls + 127) // 128) * 128          # lane-dense logits slab

    # Batch-block size: amortize grid-step overhead, but keep >= 2 grid blocks
    # so a v7x megacore ("parallel") can split the batch across both cores.
    bb = max(1, min(block_batch, n // 2)) if n >= 2 else 1
    n_blocks = pl.cdiv(n, bb)
    n_pad = n_blocks * bb

    # Cheap space-to-depth of the zero-padded input (pure layout op; replaces
    # any wrapper-side im2col patch tensor).  Extra batch rows (if any) are
    # zero-padded and sliced off after the call.
    xp = jnp.pad(x, ((0, n_pad - n), (1, 1), (1, 1), (0, 0)))
    xsd = (xp.reshape(n_pad, h2, 2, w2, 2, cin)
             .transpose(0, 1, 3, 2, 4, 5)
             .reshape(n_pad, h2, w2, 4 * cin))

    # Parameter packing: bf16 for MXU operands, f32 for VPU/bias paths.
    stem_w = params["stem_w"].reshape(9, cin, c_stem).astype(jnp.float32)
    stem_b = params["stem_b"].reshape(1, c_stem).astype(jnp.float32)
    exp_w = params["exp_w"].astype(jnp.bfloat16)
    exp_b = params["exp_b"].reshape(1, c_exp).astype(jnp.float32)
    dw_w = params["dw_w"].astype(jnp.float32)                     # (9, Cexp)
    dw_b = params["dw_b"].reshape(1, c_exp).astype(jnp.float32)
    proj_w = params["proj_w"].astype(jnp.bfloat16)
    proj_b = params["proj_b"].reshape(1, c_stem).astype(jnp.float32)
    fc_w = jnp.zeros((c_stem, ncls_pad), jnp.bfloat16)
    fc_w = fc_w.at[:, :ncls].set(params["fc_w"].astype(jnp.bfloat16))
    fc_b = jnp.zeros((1, ncls_pad), jnp.float32)
    fc_b = fc_b.at[0, :ncls].set(params["fc_b"].astype(jnp.float32))

    kernel = functools.partial(_trick_fused_kernel, bb=bb, ho=ho, wo=wo,
                               cin=cin, c_stem=c_stem, c_exp=c_exp)

    const2 = lambda b: (0, 0)
    const3 = lambda b: (0, 0, 0)

    out = pl.pallas_call(
        kernel,
        out_shape=jax.ShapeDtypeStruct((n_blocks, bb, ncls_pad), jnp.float32),
        grid_spec=pltpu.PrefetchScalarGridSpec(
            num_scalar_prefetch=0,
            grid=(n_blocks,),   # one batch-block per grid step
            in_specs=[
                pl.BlockSpec((bb, h2, w2, 4 * cin), lambda b: (b, 0, 0, 0)),
                pl.BlockSpec((9, cin, c_stem), const3),
                pl.BlockSpec((1, c_stem), const2),
                pl.BlockSpec((c_stem, c_exp), const2),
                pl.BlockSpec((1, c_exp), const2),
                pl.BlockSpec((9, c_exp), const2),
                pl.BlockSpec((1, c_exp), const2),
                pl.BlockSpec((c_exp, c_stem), const2),
                pl.BlockSpec((1, c_stem), const2),
                pl.BlockSpec((c_stem, ncls_pad), const2),
                pl.BlockSpec((1, ncls_pad), const2),
            ],
            out_specs=pl.BlockSpec((None, bb, ncls_pad), lambda b: (b, 0, 0)),
            scratch_shapes=[
                pltpu.VMEM((bb, ho + 2, wo + 2, c_exp), jnp.float32),  # dw halo
            ],
        ),
        compiler_params=pltpu.CompilerParams(
            # Batch axis is embarrassingly parallel -> megacore split.
            dimension_semantics=("parallel",),
            vmem_limit_bytes=32 * 1024 * 1024,
        ),
    )(xsd, stem_w, stem_b, exp_w, exp_b, dw_w, dw_b, proj_w, proj_b, fc_w, fc_b)

    return out.reshape(n_pad, ncls_pad)[:n, :ncls]   # (N, num_classes)


# ---------------------------------------------------------------------------
# Parameter init (BatchNorm assumed folded into conv weights/biases, QAT-style).
# ---------------------------------------------------------------------------
def init_params(key, num_classes, cin=3, c_stem=16, c_expand=32):
    ks = jax.random.split(key, 10)

    def w(k, shape, scale=0.1):
        return scale * jax.random.normal(k, shape, jnp.float32)

    return {
        "stem_w": w(ks[0], (9 * cin, c_stem)),   # rows ordered (ky, kx, cin)
        "stem_b": w(ks[1], (c_stem,)),
        "exp_w": w(ks[2], (c_stem, c_expand)),
        "exp_b": w(ks[3], (c_expand,)),
        "dw_w": w(ks[4], (9, c_expand)),
        "dw_b": w(ks[5], (c_expand,)),
        "proj_w": w(ks[6], (c_expand, c_stem)),
        "proj_b": w(ks[7], (c_stem,)),
        "fc_w": w(ks[8], (c_stem, num_classes)),
        "fc_b": w(ks[9], (num_classes,)),
    }


if __name__ == "__main__":
    key = jax.random.PRNGKey(0)
    kx, kp = jax.random.split(key)

    num_classes = 10
    x = jax.random.normal(kx, (2, 3, 16, 16), jnp.float32)  # small NCHW input
    params = init_params(kp, num_classes=num_classes)

    fwd = jax.jit(functools.partial(trick_model_forward, params))
    logits = fwd(x)
    jax.block_until_ready(logits)
    assert logits.shape == (2, num_classes)
    print("KERNEL_OK")
</pallas_src>

<mosaic_0001>
module attributes {stable_mosaic.version = 11 : i64} {
  func.func @_trick_fused_kernel(%arg0: i32, %arg1: memref<1x9x9x12xf32, #tpu.memory_space<vmem>>, %arg2: memref<9x3x16xf32, #tpu.memory_space<vmem>>, %arg3: memref<1x16xf32, #tpu.memory_space<vmem>>, %arg4: memref<16x32xbf16, #tpu.memory_space<vmem>>, %arg5: memref<1x32xf32, #tpu.memory_space<vmem>>, %arg6: memref<9x32xf32, #tpu.memory_space<vmem>>, %arg7: memref<1x32xf32, #tpu.memory_space<vmem>>, %arg8: memref<32x16xbf16, #tpu.memory_space<vmem>>, %arg9: memref<1x16xf32, #tpu.memory_space<vmem>>, %arg10: memref<16x128xbf16, #tpu.memory_space<vmem>>, %arg11: memref<1x128xf32, #tpu.memory_space<vmem>>, %arg12: memref<1x1x128xf32, #tpu.memory_space<vmem>>, %arg13: memref<1x10x10x32xf32, #tpu.memory_space<vmem>>) attributes {dimension_semantics = [#tpu.dimension_semantics<parallel>], iteration_bounds = array<i64: 2>, scalar_prefetch = 0 : i64, scratch_operands = 1 : i64, tpu.core_type = #tpu.core_type<tc>, window_params = [{transform_indices = @transform_0, window_bounds = array<i64: 1, 9, 9, 12>}, {pipeline_mode = #tpu.pipeline_mode<synchronous>, transform_indices = @transform_1, window_bounds = array<i64: 9, 3, 16>}, {pipeline_mode = #tpu.pipeline_mode<synchronous>, transform_indices = @transform_2, window_bounds = array<i64: 1, 16>}, {pipeline_mode = #tpu.pipeline_mode<synchronous>, transform_indices = @transform_3, window_bounds = array<i64: 16, 32>}, {pipeline_mode = #tpu.pipeline_mode<synchronous>, transform_indices = @transform_4, window_bounds = array<i64: 1, 32>}, {pipeline_mode = #tpu.pipeline_mode<synchronous>, transform_indices = @transform_5, window_bounds = array<i64: 9, 32>}, {pipeline_mode = #tpu.pipeline_mode<synchronous>, transform_indices = @transform_6, window_bounds = array<i64: 1, 32>}, {pipeline_mode = #tpu.pipeline_mode<synchronous>, transform_indices = @transform_7, window_bounds = array<i64: 32, 16>}, {pipeline_mode = #tpu.pipeline_mode<synchronous>, transform_indices = @transform_8, window_bounds = array<i64: 1, 16>}, {pipeline_mode = #tpu.pipeline_mode<synchronous>, transform_indices = @transform_9, window_bounds = array<i64: 16, 128>}, {pipeline_mode = #tpu.pipeline_mode<synchronous>, transform_indices = @transform_10, window_bounds = array<i64: 1, 128>}, {transform_indices = @transform_11, window_bounds = array<i64: 1, 1, 128>}]} {
    %c0 = arith.constant 0 : index
    %c0_0 = arith.constant 0 : index
    %c0_1 = arith.constant 0 : index
    %c0_2 = arith.constant 0 : index
    %0 = vector.load %arg1[%c0, %c0_0, %c0_1, %c0_2] : memref<1x9x9x12xf32, #tpu.memory_space<vmem>>, vector<1x9x9x12xf32>
    %c0_3 = arith.constant 0 : index
    %c0_4 = arith.constant 0 : index
    %c0_5 = arith.constant 0 : index
    %1 = vector.load %arg2[%c0_3, %c0_4, %c0_5] : memref<9x3x16xf32, #tpu.memory_space<vmem>>, vector<9x3x16xf32>
    %cst = arith.constant 0.000000e+00 : f32
    %2 = vector.broadcast %cst : f32 to vector<64x16xf32>
    %3 = vector.extract_strided_slice %0 {offsets = [0, 0, 0, 0], sizes = [1, 8, 8, 3], strides = [1, 1, 1, 1]} : vector<1x9x9x12xf32> to vector<1x8x8x3xf32>
    %4 = vector.shape_cast %3 : vector<1x8x8x3xf32> to vector<64x3xf32>
    %5 = arith.truncf %4 : vector<64x3xf32> to vector<64x3xbf16>
    %6 = vector.extract_strided_slice %1 {offsets = [0, 0, 0], sizes = [1, 3, 16], strides = [1, 1, 1]} : vector<9x3x16xf32> to vector<1x3x16xf32>
    %7 = vector.shape_cast %6 : vector<1x3x16xf32> to vector<3x16xf32>
    %8 = arith.truncf %7 : vector<3x16xf32> to vector<3x16xbf16>
    %cst_6 = arith.constant dense<0.000000e+00> : vector<64x16xf32>
    %9 = tpu.matmul %5, %8, %cst_6 {dimension_numbers = #tpu.dot_dimension_numbers<[1], [0], [0], [1], [0, 0, 1, 1], [], []>} : vector<64x3xbf16>, vector<3x16xbf16>, vector<64x16xf32> -> vector<64x16xf32>
    %10 = arith.addf %2, %9 : vector<64x16xf32>
    %11 = vector.extract_strided_slice %0 {offsets = [0, 0, 0, 3], sizes = [1, 8, 8, 3], strides = [1, 1, 1, 1]} : vector<1x9x9x12xf32> to vector<1x8x8x3xf32>
    %12 = vector.shape_cast %11 : vector<1x8x8x3xf32> to vector<64x3xf32>
    %13 = arith.truncf %12 : vector<64x3xf32> to vector<64x3xbf16>
    %14 = vector.extract_strided_slice %1 {offsets = [1, 0, 0], sizes = [1, 3, 16], strides = [1, 1, 1]} : vector<9x3x16xf32> to vector<1x3x16xf32>
    %15 = vector.shape_cast %14 : vector<1x3x16xf32> to vector<3x16xf32>
    %16 = arith.truncf %15 : vector<3x16xf32> to vector<3x16xbf16>
    %cst_7 = arith.constant dense<0.000000e+00> : vector<64x16xf32>
    %17 = tpu.matmul %13, %16, %cst_7 {dimension_numbers = #tpu.dot_dimension_numbers<[1], [0], [0], [1], [0, 0, 1, 1], [], []>} : vector<64x3xbf16>, vector<3x16xbf16>, vector<64x16xf32> -> vector<64x16xf32>
    %18 = arith.addf %10, %17 : vector<64x16xf32>
    %19 = vector.extract_strided_slice %0 {offsets = [0, 0, 1, 0], sizes = [1, 8, 8, 3], strides = [1, 1, 1, 1]} : vector<1x9x9x12xf32> to vector<1x8x8x3xf32>
    %20 = vector.shape_cast %19 : vector<1x8x8x3xf32> to vector<64x3xf32>
    %21 = arith.truncf %20 : vector<64x3xf32> to vector<64x3xbf16>
    %22 = vector.extract_strided_slice %1 {offsets = [2, 0, 0], sizes = [1, 3, 16], strides = [1, 1, 1]} : vector<9x3x16xf32> to vector<1x3x16xf32>
    %23 = vector.shape_cast %22 : vector<1x3x16xf32> to vector<3x16xf32>
    %24 = arith.truncf %23 : vector<3x16xf32> to vector<3x16xbf16>
    %cst_8 = arith.constant dense<0.000000e+00> : vector<64x16xf32>
    %25 = tpu.matmul %21, %24, %cst_8 {dimension_numbers = #tpu.dot_dimension_numbers<[1], [0], [0], [1], [0, 0, 1, 1], [], []>} : vector<64x3xbf16>, vector<3x16xbf16>, vector<64x16xf32> -> vector<64x16xf32>
    %26 = arith.addf %18, %25 : vector<64x16xf32>
    %27 = vector.extract_strided_slice %0 {offsets = [0, 0, 0, 6], sizes = [1, 8, 8, 3], strides = [1, 1, 1, 1]} : vector<1x9x9x12xf32> to vector<1x8x8x3xf32>
    %28 = vector.shape_cast %27 : vector<1x8x8x3xf32> to vector<64x3xf32>
    %29 = arith.truncf %28 : vector<64x3xf32> to vector<64x3xbf16>
    %30 = vector.extract_strided_slice %1 {offsets = [3, 0, 0], sizes = [1, 3, 16], strides = [1, 1, 1]} : vector<9x3x16xf32> to vector<1x3x16xf32>
    %31 = vector.shape_cast %30 : vector<1x3x16xf32> to vector<3x16xf32>
    %32 = arith.truncf %31 : vector<3x16xf32> to vector<3x16xbf16>
    %cst_9 = arith.constant dense<0.000000e+00> : vector<64x16xf32>
    %33 = tpu.matmul %29, %32, %cst_9 {dimension_numbers = #tpu.dot_dimension_numbers<[1], [0], [0], [1], [0, 0, 1, 1], [], []>} : vector<64x3xbf16>, vector<3x16xbf16>, vector<64x16xf32> -> vector<64x16xf32>
    %34 = arith.addf %26, %33 : vector<64x16xf32>
    %35 = vector.extract_strided_slice %0 {offsets = [0, 0, 0, 9], sizes = [1, 8, 8, 3], strides = [1, 1, 1, 1]} : vector<1x9x9x12xf32> to vector<1x8x8x3xf32>
    %36 = vector.shape_cast %35 : vector<1x8x8x3xf32> to vector<64x3xf32>
    %37 = arith.truncf %36 : vector<64x3xf32> to vector<64x3xbf16>
    %38 = vector.extract_strided_slice %1 {offsets = [4, 0, 0], sizes = [1, 3, 16], strides = [1, 1, 1]} : vector<9x3x16xf32> to vector<1x3x16xf32>
    %39 = vector.shape_cast %38 : vector<1x3x16xf32> to vector<3x16xf32>
    %40 = arith.truncf %39 : vector<3x16xf32> to vector<3x16xbf16>
    %cst_10 = arith.constant dense<0.000000e+00> : vector<64x16xf32>
    %41 = tpu.matmul %37, %40, %cst_10 {dimension_numbers = #tpu.dot_dimension_numbers<[1], [0], [0], [1], [0, 0, 1, 1], [], []>} : vector<64x3xbf16>, vector<3x16xbf16>, vector<64x16xf32> -> vector<64x16xf32>
    %42 = arith.addf %34, %41 : vector<64x16xf32>
    %43 = vector.extract_strided_slice %0 {offsets = [0, 0, 1, 6], sizes = [1, 8, 8, 3], strides = [1, 1, 1, 1]} : vector<1x9x9x12xf32> to vector<1x8x8x3xf32>
    %44 = vector.shape_cast %43 : vector<1x8x8x3xf32> to vector<64x3xf32>
    %45 = arith.truncf %44 : vector<64x3xf32> to vector<64x3xbf16>
    %46 = vector.extract_strided_slice %1 {offsets = [5, 0, 0], sizes = [1, 3, 16], strides = [1, 1, 1]} : vector<9x3x16xf32> to vector<1x3x16xf32>
    %47 = vector.shape_cast %46 : vector<1x3x16xf32> to vector<3x16xf32>
    %48 = arith.truncf %47 : vector<3x16xf32> to vector<3x16xbf16>
    %cst_11 = arith.constant dense<0.000000e+00> : vector<64x16xf32>
    %49 = tpu.matmul %45, %48, %cst_11 {dimension_numbers = #tpu.dot_dimension_numbers<[1], [0], [0], [1], [0, 0, 1, 1], [], []>} : vector<64x3xbf16>, vector<3x16xbf16>, vector<64x16xf32> -> vector<64x16xf32>
    %50 = arith.addf %42, %49 : vector<64x16xf32>
    %51 = vector.extract_strided_slice %0 {offsets = [0, 1, 0, 0], sizes = [1, 8, 8, 3], strides = [1, 1, 1, 1]} : vector<1x9x9x12xf32> to vector<1x8x8x3xf32>
    %52 = vector.shape_cast %51 : vector<1x8x8x3xf32> to vector<64x3xf32>
    %53 = arith.truncf %52 : vector<64x3xf32> to vector<64x3xbf16>
    %54 = vector.extract_strided_slice %1 {offsets = [6, 0, 0], sizes = [1, 3, 16], strides = [1, 1, 1]} : vector<9x3x16xf32> to vector<1x3x16xf32>
    %55 = vector.shape_cast %54 : vector<1x3x16xf32> to vector<3x16xf32>
    %56 = arith.truncf %55 : vector<3x16xf32> to vector<3x16xbf16>
    %cst_12 = arith.constant dense<0.000000e+00> : vector<64x16xf32>
    %57 = tpu.matmul %53, %56, %cst_12 {dimension_numbers = #tpu.dot_dimension_numbers<[1], [0], [0], [1], [0, 0, 1, 1], [], []>} : vector<64x3xbf16>, vector<3x16xbf16>, vector<64x16xf32> -> vector<64x16xf32>
    %58 = arith.addf %50, %57 : vector<64x16xf32>
    %59 = vector.extract_strided_slice %0 {offsets = [0, 1, 0, 3], sizes = [1, 8, 8, 3], strides = [1, 1, 1, 1]} : vector<1x9x9x12xf32> to vector<1x8x8x3xf32>
    %60 = vector.shape_cast %59 : vector<1x8x8x3xf32> to vector<64x3xf32>
    %61 = arith.truncf %60 : vector<64x3xf32> to vector<64x3xbf16>
    %62 = vector.extract_strided_slice %1 {offsets = [7, 0, 0], sizes = [1, 3, 16], strides = [1, 1, 1]} : vector<9x3x16xf32> to vector<1x3x16xf32>
    %63 = vector.shape_cast %62 : vector<1x3x16xf32> to vector<3x16xf32>
    %64 = arith.truncf %63 : vector<3x16xf32> to vector<3x16xbf16>
    %cst_13 = arith.constant dense<0.000000e+00> : vector<64x16xf32>
    %65 = tpu.matmul %61, %64, %cst_13 {dimension_numbers = #tpu.dot_dimension_numbers<[1], [0], [0], [1], [0, 0, 1, 1], [], []>} : vector<64x3xbf16>, vector<3x16xbf16>, vector<64x16xf32> -> vector<64x16xf32>
    %66 = arith.addf %58, %65 : vector<64x16xf32>
    %67 = vector.extract_strided_slice %0 {offsets = [0, 1, 1, 0], sizes = [1, 8, 8, 3], strides = [1, 1, 1, 1]} : vector<1x9x9x12xf32> to vector<1x8x8x3xf32>
    %68 = vector.shape_cast %67 : vector<1x8x8x3xf32> to vector<64x3xf32>
    %69 = arith.truncf %68 : vector<64x3xf32> to vector<64x3xbf16>
    %70 = vector.extract_strided_slice %1 {offsets = [8, 0, 0], sizes = [1, 3, 16], strides = [1, 1, 1]} : vector<9x3x16xf32> to vector<1x3x16xf32>
    %71 = vector.shape_cast %70 : vector<1x3x16xf32> to vector<3x16xf32>
    %72 = arith.truncf %71 : vector<3x16xf32> to vector<3x16xbf16>
    %cst_14 = arith.constant dense<0.000000e+00> : vector<64x16xf32>
    %73 = tpu.matmul %69, %72, %cst_14 {dimension_numbers = #tpu.dot_dimension_numbers<[1], [0], [0], [1], [0, 0, 1, 1], [], []>} : vector<64x3xbf16>, vector<3x16xbf16>, vector<64x16xf32> -> vector<64x16xf32>
    %74 = arith.addf %66, %73 : vector<64x16xf32>
    %c0_15 = arith.constant 0 : index
    %c0_16 = arith.constant 0 : index
    %75 = vector.load %arg3[%c0_15, %c0_16] : memref<1x16xf32, #tpu.memory_space<vmem>>, vector<1x16xf32>
    %76 = vector.broadcast %75 : vector<1x16xf32> to vector<64x16xf32>
    %77 = arith.addf %74, %76 : vector<64x16xf32>
    %cst_17 = arith.constant 0.000000e+00 : f32
    %cst_18 = arith.constant 6.000000e+00 : f32
    %78 = vector.broadcast %cst_17 : f32 to vector<64x16xf32>
    %79 = arith.maximumf %78, %77 : vector<64x16xf32>
    %80 = vector.broadcast %cst_18 : f32 to vector<64x16xf32>
    %81 = arith.minimumf %80, %79 : vector<64x16xf32>
    %82 = arith.truncf %81 : vector<64x16xf32> to vector<64x16xbf16>
    %c0_19 = arith.constant 0 : index
    %c0_20 = arith.constant 0 : index
    %83 = vector.load %arg4[%c0_19, %c0_20] : memref<16x32xbf16, #tpu.memory_space<vmem>>, vector<16x32xbf16>
    %cst_21 = arith.constant dense<0.000000e+00> : vector<64x32xf32>
    %84 = tpu.matmul %82, %83, %cst_21 {dimension_numbers = #tpu.dot_dimension_numbers<[1], [0], [0], [1], [0, 0, 1, 1], [], []>} : vector<64x16xbf16>, vector<16x32xbf16>, vector<64x32xf32> -> vector<64x32xf32>
    %c0_22 = arith.constant 0 : index
    %c0_23 = arith.constant 0 : index
    %85 = vector.load %arg5[%c0_22, %c0_23] : memref<1x32xf32, #tpu.memory_space<vmem>>, vector<1x32xf32>
    %86 = vector.broadcast %85 : vector<1x32xf32> to vector<64x32xf32>
    %87 = arith.addf %84, %86 : vector<64x32xf32>
    %cst_24 = arith.constant 0.000000e+00 : f32
    %cst_25 = arith.constant 6.000000e+00 : f32
    %88 = vector.broadcast %cst_24 : f32 to vector<64x32xf32>
    %89 = arith.maximumf %88, %87 : vector<64x32xf32>
    %90 = vector.broadcast %cst_25 : f32 to vector<64x32xf32>
    %91 = arith.minimumf %90, %89 : vector<64x32xf32>
    %cst_26 = arith.constant 0.000000e+00 : f32
    %92 = vector.broadcast %cst_26 : f32 to vector<1x1x10x32xf32>
    %c0_27 = arith.constant 0 : index
    %c0_28 = arith.constant 0 : index
    %c0_29 = arith.constant 0 : index
    %c0_30 = arith.constant 0 : index
    %93 = vector.load %arg13[%c0_27, %c0_28, %c0_29, %c0_30] : memref<1x10x10x32xf32, #tpu.memory_space<vmem>>, vector<1x1x10x32xf32>
    tpu.vector_store %arg13[%c0_27, %c0_28, %c0_29, %c0_30], %92 {strides = array<i32>} : memref<1x10x10x32xf32, #tpu.memory_space<vmem>>, vector<1x1x10x32xf32>,
    %cst_31 = arith.constant 0.000000e+00 : f32
    %94 = vector.broadcast %cst_31 : f32 to vector<1x1x10x32xf32>
    %c0_32 = arith.constant 0 : index
    %c9 = arith.constant 9 : index
    %c0_33 = arith.constant 0 : index
    %c0_34 = arith.constant 0 : index
    %95 = vector.load %arg13[%c0_32, %c9, %c0_33, %c0_34] : memref<1x10x10x32xf32, #tpu.memory_space<vmem>>, vector<1x1x10x32xf32>
    tpu.vector_store %arg13[%c0_32, %c9, %c0_33, %c0_34], %94 {strides = array<i32>} : memref<1x10x10x32xf32, #tpu.memory_space<vmem>>, vector<1x1x10x32xf32>,
    %cst_35 = arith.constant 0.000000e+00 : f32
    %96 = vector.broadcast %cst_35 : f32 to vector<1x8x1x32xf32>
    %c0_36 = arith.constant 0 : index
    %c1 = arith.constant 1 : index
    %c0_37 = arith.constant 0 : index
    %c0_38 = arith.constant 0 : index
    %97 = vector.load %arg13[%c0_36, %c1, %c0_37, %c0_38] : memref<1x10x10x32xf32, #tpu.memory_space<vmem>>, vector<1x8x1x32xf32>
    tpu.vector_store %arg13[%c0_36, %c1, %c0_37, %c0_38], %96 {strides = array<i32>} : memref<1x10x10x32xf32, #tpu.memory_space<vmem>>, vector<1x8x1x32xf32>,
    %cst_39 = arith.constant 0.000000e+00 : f32
    %98 = vector.broadcast %cst_39 : f32 to vector<1x8x1x32xf32>
    %c0_40 = arith.constant 0 : index
    %c1_41 = arith.constant 1 : index
    %c9_42 = arith.constant 9 : index
    %c0_43 = arith.constant 0 : index
    %99 = vector.load %arg13[%c0_40, %c1_41, %c9_42, %c0_43] : memref<1x10x10x32xf32, #tpu.memory_space<vmem>>, vector<1x8x1x32xf32>
    tpu.vector_store %arg13[%c0_40, %c1_41, %c9_42, %c0_43], %98 {strides = array<i32>} : memref<1x10x10x32xf32, #tpu.memory_space<vmem>>, vector<1x8x1x32xf32>,
    %100 = vector.shape_cast %91 : vector<64x32xf32> to vector<1x8x8x32xf32>
    %c0_44 = arith.constant 0 : index
    %c1_45 = arith.constant 1 : index
    %c1_46 = arith.constant 1 : index
    %c0_47 = arith.constant 0 : index
    %101 = vector.load %arg13[%c0_44, %c1_45, %c1_46, %c0_47] : memref<1x10x10x32xf32, #tpu.memory_space<vmem>>, vector<1x8x8x32xf32>
    tpu.vector_store %arg13[%c0_44, %c1_45, %c1_46, %c0_47], %100 {strides = array<i32>} : memref<1x10x10x32xf32, #tpu.memory_space<vmem>>, vector<1x8x8x32xf32>,
    %c0_48 = arith.constant 0 : index
    %c0_49 = arith.constant 0 : index
    %c0_50 = arith.constant 0 : index
    %c0_51 = arith.constant 0 : index
    %102 = vector.load %arg13[%c0_48, %c0_49, %c0_50, %c0_51] : memref<1x10x10x32xf32, #tpu.memory_space<vmem>>, vector<1x10x10x32xf32>
    %c0_52 = arith.constant 0 : index
    %c0_53 = arith.constant 0 : index
    %103 = vector.load %arg6[%c0_52, %c0_53] : memref<9x32xf32, #tpu.memory_space<vmem>>, vector<9x32xf32>
    %cst_54 = arith.constant 0.000000e+00 : f32
    %104 = vector.broadcast %cst_54 : f32 to vector<1x8x8x32xf32>
    %105 = vector.extract_strided_slice %102 {offsets = [0, 0, 0, 0], sizes = [1, 8, 8, 32], strides = [1, 1, 1, 1]} : vector<1x10x10x32xf32> to vector<1x8x8x32xf32>
    %106 = vector.extract_strided_slice %103 {offsets = [0, 0], sizes = [1, 32], strides = [1, 1]} : vector<9x32xf32> to vector<1x32xf32>
    %107 = vector.shape_cast %106 : vector<1x32xf32> to vector<32xf32>
    %108 = vector.shape_cast %107 : vector<32xf32> to vector<1x1x1x32xf32>
    %109 = vector.broadcast %108 : vector<1x1x1x32xf32> to vector<1x8x8x32xf32>
    %110 = arith.mulf %105, %109 : vector<1x8x8x32xf32>
    %111 = arith.addf %104, %110 : vector<1x8x8x32xf32>
    %112 = vector.extract_strided_slice %102 {offsets = [0, 0, 1, 0], sizes = [1, 8, 8, 32], strides = [1, 1, 1, 1]} : vector<1x10x10x32xf32> to vector<1x8x8x32xf32>
    %113 = vector.extract_strided_slice %103 {offsets = [1, 0], sizes = [1, 32], strides = [1, 1]} : vector<9x32xf32> to vector<1x32xf32>
    %114 = vector.shape_cast %113 : vector<1x32xf32> to vector<32xf32>
    %115 = vector.shape_cast %114 : vector<32xf32> to vector<1x1x1x32xf32>
    %116 = vector.broadcast %115 : vector<1x1x1x32xf32> to vector<1x8x8x32xf32>
    %117 = arith.mulf %112, %116 : vector<1x8x8x32xf32>
    %118 = arith.addf %111, %117 : vector<1x8x8x32xf32>
    %119 = vector.extract_strided_slice %102 {offsets = [0, 0, 2, 0], sizes = [1, 8, 8, 32], strides = [1, 1, 1, 1]} : vector<1x10x10x32xf32> to vector<1x8x8x32xf32>
    %120 = vector.extract_strided_slice %103 {offsets = [2, 0], sizes = [1, 32], strides = [1, 1]} : vector<9x32xf32> to vector<1x32xf32>
    %121 = vector.shape_cast %120 : vector<1x32xf32> to vector<32xf32>
    %122 = vector.shape_cast %121 : vector<32xf32> to vector<1x1x1x32xf32>
    %123 = vector.broadcast %122 : vector<1x1x1x32xf32> to vector<1x8x8x32xf32>
    %124 = arith.mulf %119, %123 : vector<1x8x8x32xf32>
    %125 = arith.addf %118, %124 : vector<1x8x8x32xf32>
    %126 = vector.extract_strided_slice %102 {offsets = [0, 1, 0, 0], sizes = [1, 8, 8, 32], strides = [1, 1, 1, 1]} : vector<1x10x10x32xf32> to vector<1x8x8x32xf32>
    %127 = vector.extract_strided_slice %103 {offsets = [3, 0], sizes = [1, 32], strides = [1, 1]} : vector<9x32xf32> to vector<1x32xf32>
    %128 = vector.shape_cast %127 : vector<1x32xf32> to vector<32xf32>
    %129 = vector.shape_cast %128 : vector<32xf32> to vector<1x1x1x32xf32>
    %130 = vector.broadcast %129 : vector<1x1x1x32xf32> to vector<1x8x8x32xf32>
    %131 = arith.mulf %126, %130 : vector<1x8x8x32xf32>
    %132 = arith.addf %125, %131 : vector<1x8x8x32xf32>
    %133 = vector.extract_strided_slice %102 {offsets = [0, 1, 1, 0], sizes = [1, 8, 8, 32], strides = [1, 1, 1, 1]} : vector<1x10x10x32xf32> to vector<1x8x8x32xf32>
    %134 = vector.extract_strided_slice %103 {offsets = [4, 0], sizes = [1, 32], strides = [1, 1]} : vector<9x32xf32> to vector<1x32xf32>
    %135 = vector.shape_cast %134 : vector<1x32xf32> to vector<32xf32>
    %136 = vector.shape_cast %135 : vector<32xf32> to vector<1x1x1x32xf32>
    %137 = vector.broadcast %136 : vector<1x1x1x32xf32> to vector<1x8x8x32xf32>
    %138 = arith.mulf %133, %137 : vector<1x8x8x32xf32>
    %139 = arith.addf %132, %138 : vector<1x8x8x32xf32>
    %140 = vector.extract_strided_slice %102 {offsets = [0, 1, 2, 0], sizes = [1, 8, 8, 32], strides = [1, 1, 1, 1]} : vector<1x10x10x32xf32> to vector<1x8x8x32xf32>
    %141 = vector.extract_strided_slice %103 {offsets = [5, 0], sizes = [1, 32], strides = [1, 1]} : vector<9x32xf32> to vector<1x32xf32>
    %142 = vector.shape_cast %141 : vector<1x32xf32> to vector<32xf32>
    %143 = vector.shape_cast %142 : vector<32xf32> to vector<1x1x1x32xf32>
    %144 = vector.broadcast %143 : vector<1x1x1x32xf32> to vector<1x8x8x32xf32>
    %145 = arith.mulf %140, %144 : vector<1x8x8x32xf32>
    %146 = arith.addf %139, %145 : vector<1x8x8x32xf32>
    %147 = vector.extract_strided_slice %102 {offsets = [0, 2, 0, 0], sizes = [1, 8, 8, 32], strides = [1, 1, 1, 1]} : vector<1x10x10x32xf32> to vector<1x8x8x32xf32>
    %148 = vector.extract_strided_slice %103 {offsets = [6, 0], sizes = [1, 32], strides = [1, 1]} : vector<9x32xf32> to vector<1x32xf32>
    %149 = vector.shape_cast %148 : vector<1x32xf32> to vector<32xf32>
    %150 = vector.shape_cast %149 : vector<32xf32> to vector<1x1x1x32xf32>
    %151 = vector.broadcast %150 : vector<1x1x1x32xf32> to vector<1x8x8x32xf32>
    %152 = arith.mulf %147, %151 : vector<1x8x8x32xf32>
    %153 = arith.addf %146, %152 : vector<1x8x8x32xf32>
    %154 = vector.extract_strided_slice %102 {offsets = [0, 2, 1, 0], sizes = [1, 8, 8, 32], strides = [1, 1, 1, 1]} : vector<1x10x10x32xf32> to vector<1x8x8x32xf32>
    %155 = vector.extract_strided_slice %103 {offsets = [7, 0], sizes = [1, 32], strides = [1, 1]} : vector<9x32xf32> to vector<1x32xf32>
    %156 = vector.shape_cast %155 : vector<1x32xf32> to vector<32xf32>
    %157 = vector.shape_cast %156 : vector<32xf32> to vector<1x1x1x32xf32>
    %158 = vector.broadcast %157 : vector<1x1x1x32xf32> to vector<1x8x8x32xf32>
    %159 = arith.mulf %154, %158 : vector<1x8x8x32xf32>
    %160 = arith.addf %153, %159 : vector<1x8x8x32xf32>
    %161 = vector.extract_strided_slice %102 {offsets = [0, 2, 2, 0], sizes = [1, 8, 8, 32], strides = [1, 1, 1, 1]} : vector<1x10x10x32xf32> to vector<1x8x8x32xf32>
    %162 = vector.extract_strided_slice %103 {offsets = [8, 0], sizes = [1, 32], strides = [1, 1]} : vector<9x32xf32> to vector<1x32xf32>
    %163 = vector.shape_cast %162 : vector<1x32xf32> to vector<32xf32>
    %164 = vector.shape_cast %163 : vector<32xf32> to vector<1x1x1x32xf32>
    %165 = vector.broadcast %164 : vector<1x1x1x32xf32> to vector<1x8x8x32xf32>
    %166 = arith.mulf %161, %165 : vector<1x8x8x32xf32>
    %167 = arith.addf %160, %166 : vector<1x8x8x32xf32>
    %c0_55 = arith.constant 0 : index
    %c0_56 = arith.constant 0 : index
    %168 = vector.load %arg7[%c0_55, %c0_56] : memref<1x32xf32, #tpu.memory_space<vmem>>, vector<1x32xf32>
    %169 = vector.shape_cast %168 : vector<1x32xf32> to vector<1x1x1x32xf32>
    %170 = vector.broadcast %169 : vector<1x1x1x32xf32> to vector<1x8x8x32xf32>
    %171 = arith.addf %167, %170 : vector<1x8x8x32xf32>
    %cst_57 = arith.constant 0.000000e+00 : f32
    %cst_58 = arith.constant 6.000000e+00 : f32
    %172 = vector.broadcast %cst_57 : f32 to vector<1x8x8x32xf32>
    %173 = arith.maximumf %172, %171 : vector<1x8x8x32xf32>
    %174 = vector.broadcast %cst_58 : f32 to vector<1x8x8x32xf32>
    %175 = arith.minimumf %174, %173 : vector<1x8x8x32xf32>
    %176 = vector.shape_cast %175 : vector<1x8x8x32xf32> to vector<64x32xf32>
    %177 = arith.truncf %176 : vector<64x32xf32> to vector<64x32xbf16>
    %c0_59 = arith.constant 0 : index
    %c0_60 = arith.constant 0 : index
    %178 = vector.load %arg8[%c0_59, %c0_60] : memref<32x16xbf16, #tpu.memory_space<vmem>>, vector<32x16xbf16>
    %cst_61 = arith.constant dense<0.000000e+00> : vector<64x16xf32>
    %179 = tpu.matmul %177, %178, %cst_61 {dimension_numbers = #tpu.dot_dimension_numbers<[1], [0], [0], [1], [0, 0, 1, 1], [], []>} : vector<64x32xbf16>, vector<32x16xbf16>, vector<64x16xf32> -> vector<64x16xf32>
    %c0_62 = arith.constant 0 : index
    %c0_63 = arith.constant 0 : index
    %180 = vector.load %arg9[%c0_62, %c0_63] : memref<1x16xf32, #tpu.memory_space<vmem>>, vector<1x16xf32>
    %181 = vector.broadcast %180 : vector<1x16xf32> to vector<64x16xf32>
    %182 = arith.addf %179, %181 : vector<64x16xf32>
    %183 = arith.addf %182, %81 : vector<64x16xf32>
    %184 = vector.shape_cast %183 : vector<64x16xf32> to vector<1x64x16xf32>
    %cst_64 = arith.constant dense<0.000000e+00> : vector<1x16xf32>
    %185 = vector.multi_reduction <add>, %184, %cst_64 [1] : vector<1x64x16xf32> to vector<1x16xf32>
    %cst_65 = arith.constant 6.400000e+01 : f32
    %186 = vector.broadcast %cst_65 : f32 to vector<1x16xf32>
    %187 = arith.divf %185, %186 : vector<1x16xf32>
    %188 = arith.truncf %187 : vector<1x16xf32> to vector<1x16xbf16>
    %c0_66 = arith.constant 0 : index
    %c0_67 = arith.constant 0 : index
    %189 = vector.load %arg10[%c0_66, %c0_67] : memref<16x128xbf16, #tpu.memory_space<vmem>>, vector<16x128xbf16>
    %cst_68 = arith.constant dense<0.000000e+00> : vector<1x128xf32>
    %190 = tpu.matmul %188, %189, %cst_68 {dimension_numbers = #tpu.dot_dimension_numbers<[1], [0], [0], [1], [0, 0, 1, 1], [], []>} : vector<1x16xbf16>, vector<16x128xbf16>, vector<1x128xf32> -> vector<1x128xf32>
    %c0_69 = arith.constant 0 : index
    %c0_70 = arith.constant 0 : index
    %191 = vector.load %arg11[%c0_69, %c0_70] : memref<1x128xf32, #tpu.memory_space<vmem>>, vector<1x128xf32>
    %192 = arith.addf %190, %191 : vector<1x128xf32>
    %c0_71 = arith.constant 0 : index
    %c0_72 = arith.constant 0 : index
    %c0_73 = arith.constant 0 : index
    %193 = vector.load %arg12[%c0_71, %c0_72, %c0_73] : memref<1x1x128xf32, #tpu.memory_space<vmem>>, vector<1x1x128xf32>
    %194 = vector.shape_cast %193 : vector<1x1x128xf32> to vector<1x128xf32>
    %195 = vector.shape_cast %192 : vector<1x128xf32> to vector<1x1x128xf32>
    tpu.vector_store %arg12[%c0_71, %c0_72, %c0_73], %195 {strides = array<i32>} : memref<1x1x128xf32, #tpu.memory_space<vmem>>, vector<1x1x128xf32>,
    return
  }
  func.func @transform_0(%arg0: i32) -> (i32, i32, i32, i32) {
    %c0_i32 = arith.constant 0 : i32
    %c0_i32_0 = arith.constant 0 : i32
    %c0_i32_1 = arith.constant 0 : i32
    %c0_i32_2 = arith.constant 0 : i32
    return %arg0, %c0_i32, %c0_i32_0, %c0_i32_1 : i32, i32, i32, i32
  }
  func.func @transform_1(%arg0: i32) -> (i32, i32, i32) {
    %c0_i32 = arith.constant 0 : i32
    %c0_i32_0 = arith.constant 0 : i32
    %c0_i32_1 = arith.constant 0 : i32
    %c0_i32_2 = arith.constant 0 : i32
    return %c0_i32, %c0_i32_0, %c0_i32_1 : i32, i32, i32
  }
  func.func @transform_2(%arg0: i32) -> (i32, i32) {
    %c0_i32 = arith.constant 0 : i32
    %c0_i32_0 = arith.constant 0 : i32
    %c0_i32_1 = arith.constant 0 : i32
    return %c0_i32, %c0_i32_0 : i32, i32
  }
  func.func @transform_3(%arg0: i32) -> (i32, i32) {
    %c0_i32 = arith.constant 0 : i32
    %c0_i32_0 = arith.constant 0 : i32
    %c0_i32_1 = arith.constant 0 : i32
    return %c0_i32, %c0_i32_0 : i32, i32
  }
  func.func @transform_4(%arg0: i32) -> (i32, i32) {
    %c0_i32 = arith.constant 0 : i32
    %c0_i32_0 = arith.constant 0 : i32
    %c0_i32_1 = arith.constant 0 : i32
    return %c0_i32, %c0_i32_0 : i32, i32
  }
  func.func @transform_5(%arg0: i32) -> (i32, i32) {
    %c0_i32 = arith.constant 0 : i32
    %c0_i32_0 = arith.constant 0 : i32
    %c0_i32_1 = arith.constant 0 : i32
    return %c0_i32, %c0_i32_0 : i32, i32
  }
  func.func @transform_6(%arg0: i32) -> (i32, i32) {
    %c0_i32 = arith.constant 0 : i32
    %c0_i32_0 = arith.constant 0 : i32
    %c0_i32_1 = arith.constant 0 : i32
    return %c0_i32, %c0_i32_0 : i32, i32
  }
  func.func @transform_7(%arg0: i32) -> (i32, i32) {
    %c0_i32 = arith.constant 0 : i32
    %c0_i32_0 = arith.constant 0 : i32
    %c0_i32_1 = arith.constant 0 : i32
    return %c0_i32, %c0_i32_0 : i32, i32
  }
  func.func @transform_8(%arg0: i32) -> (i32, i32) {
    %c0_i32 = arith.constant 0 : i32
    %c0_i32_0 = arith.constant 0 : i32
    %c0_i32_1 = arith.constant 0 : i32
    return %c0_i32, %c0_i32_0 : i32, i32
  }
  func.func @transform_9(%arg0: i32) -> (i32, i32) {
    %c0_i32 = arith.constant 0 : i32
    %c0_i32_0 = arith.constant 0 : i32
    %c0_i32_1 = arith.constant 0 : i32
    return %c0_i32, %c0_i32_0 : i32, i32
  }
  func.func @transform_10(%arg0: i32) -> (i32, i32) {
    %c0_i32 = arith.constant 0 : i32
    %c0_i32_0 = arith.constant 0 : i32
    %c0_i32_1 = arith.constant 0 : i32
    return %c0_i32, %c0_i32_0 : i32, i32
  }
  func.func @transform_11(%arg0: i32) -> (i32, i32, i32) {
    %c0_i32 = arith.constant 0 : i32
    %c0_i32_0 = arith.constant 0 : i32
    %c0_i32_1 = arith.constant 0 : i32
    return %arg0, %c0_i32, %c0_i32_0 : i32, i32, i32
  }
}

</mosaic_0001>

<llo_original>
// kernel: trick_model_forward.1
$region0: #{trick_model_forward.1}
  #allocation0 [shape = 'u32[]', space=smem, size = 0x4, offset = 0x4, fixed_abs, tag = 'smem constant byte address 0x4 - core index']
  #allocation1 [shape = 'u32[72,128]{1,0:T(1,128)}', space=vmem, size = 0x9000, scoped, tag = 'internal scratch']
  #allocation2 [shape = 'f32[1,10,10,32]{3,2,1,0:T(8,128)}', space=vmem, size = 0x14000, scoped, tag = 'scratch operand']
  %s0 = inlined_call_operand.vmem [shape: f32[2,9,9,12], index: 0, kind: input, shape index: {}]
  %s1 = inlined_call_operand.vmem [shape: f32[9,3,16], index: 1, kind: input, shape index: {}]
  %s2 = inlined_call_operand.vmem [shape: f32[1,16], index: 2, kind: input, shape index: {}]
  %s3 = inlined_call_operand.vmem [shape: bf16[16,32], index: 3, kind: input, shape index: {}]
  %s4 = inlined_call_operand.vmem [shape: f32[1,32], index: 4, kind: input, shape index: {}]
  %s5 = inlined_call_operand.vmem [shape: f32[9,32], index: 5, kind: input, shape index: {}]
  %s6 = inlined_call_operand.vmem [shape: f32[1,32], index: 6, kind: input, shape index: {}]
  %s7 = inlined_call_operand.vmem [shape: bf16[32,16], index: 7, kind: input, shape index: {}]
  %s8 = inlined_call_operand.vmem [shape: f32[1,16], index: 8, kind: input, shape index: {}]
  %s9 = inlined_call_operand.vmem [shape: bf16[16,128], index: 9, kind: input, shape index: {}]
  %s10 = inlined_call_operand.vmem [shape: f32[1,128], index: 10, kind: input, shape index: {}]
  %s11 = inlined_call_operand.hbm [shape: f32[2,1,128], index: 11, kind: output, shape index: {}]
  %s12 = sld [smem:[#allocation0]]
  $region77: #{trick_model_forward.1} parent=0
    _
  %s14 = ssub.s32 1, %s12
  %s15 = scalar_select 0, %s14, %s12
  $region1: #{trick_model_forward.1} parent=0
    #allocation3 [shape = 'u8[1024]{0}', space=vmem, size = 0x400, scoped, tag = 'output window, operand 0']
    #allocation4 [shape = 's32[2]{0}', space=sflag, size = 0x8, scoped, tag = 'scoped memory for trick_model_forward.1']
    %16 = vsyncpa [#allocation4], 0
    %s17 = scalar_lea.sflag [#allocation4], 1
    %18 = vsyncpa %s17, 0
    loop: start=0, step=1, limit=4
    $region2: #{trick_model_forward.1} parent=1 // loop_pre_header
      _
    $region3: #{trick_model_forward.1} parent=1 // loop_header
      %s20 = sphi 0, %s24
      %p21 = scmp.ge.s32.totalorder %s20, 4
      %s30 = sphi 0, %s32
      %s33 = sphi 0, %s30
      %s34 = sphi 0, %s33
      %s50 = sphi 0, %s34
      %s54 = sphi 0, %s54
      %s56 = sphi 0, %s54
      %s57 = sphi 0, %s56
      %s71 = sphi 0, %s57
      %s75 = sphi 0, %s75
      %s77 = sphi 0, %s75
      %s78 = sphi 0, %s77
      %s92 = sphi 0, %s78
      %s96 = sphi 0, %s96
      %s98 = sphi 0, %s96
      %s99 = sphi 0, %s98
      %s113 = sphi 0, %s99
      %s117 = sphi 0, %s117
      %s119 = sphi 0, %s117
      %s120 = sphi 0, %s119
      %s134 = sphi 0, %s120
      %s138 = sphi 0, %s138
      %s140 = sphi 0, %s138
      %s141 = sphi 0, %s140
      %s155 = sphi 0, %s141
      %s159 = sphi 0, %s159
      %s161 = sphi 0, %s159
      %s162 = sphi 0, %s161
      %s176 = sphi 0, %s162
      %s180 = sphi 0, %s180
      %s182 = sphi 0, %s180
      %s183 = sphi 0, %s182
      %s197 = sphi 0, %s183
      %s201 = sphi 0, %s201
      %s203 = sphi 0, %s201
      %s204 = sphi 0, %s203
      %s218 = sphi 0, %s204
      %s222 = sphi 0, %s222
      %s224 = sphi 0, %s222
      %s225 = sphi 0, %s224
      %s239 = sphi 0, %s225
      %s243 = sphi 0, %s243
      %s245 = sphi 0, %s243
      %s246 = sphi 0, %s245
      %s260 = sphi 0, %s246
      %s266 = sphi 0, %s268
      %s269 = sphi 0, %s266
      %s270 = sphi 0, %s269
      %s286 = sphi 0, %s270
    $region4: #{trick_model_forward.1} parent=1 // loop_header_branch
      %23 = sbr.rel (%p21) target = $region8
    $region5: #{trick_model_forward.1} parent=1 // loop_body
      %s25 = ssub.s32 %s20, 1
      %s26 = ssub.s32 %s20, 2
      %s27 = sadd.s32 %s20, 1
      %s28 = ssub.s32 %s20, %s27
      %p29 = scmp.eq.s32.totalorder %s28, 0
      %s31 = sadd.s32 %s30, 1
      %s32 = scalar_select %p29, %s30, %s31
      %p35 = pneg %p29
      %p36 = scmp.eq.s32.totalorder %s20, 1
      %p37 = por %p35, %p36
      %p38 = scmp.ne.s32.totalorder %s30, %s33
      %p39 = scmp.eq.s32.totalorder %s20, 0
      %p40 = por %p38, %p39
      %p41 = scmp.ne.s32.totalorder %s30, %s33
      %p42 = scmp.eq.s32.totalorder %s25, 1
      %p43 = por %p41, %p42
      %p44 = scmp.ne.s32.totalorder %s33, %s34
      %p45 = scmp.eq.s32.totalorder %s25, 0
      %p46 = por %p44, %p45
      %p47 = scmp.ne.s32.totalorder %s33, %s34
      %p48 = scmp.eq.s32.totalorder %s26, 1
      %p49 = por %p47, %p48
      %p51 = scmp.ne.s32.totalorder %s34, %s50
      %p52 = scmp.eq.s32.totalorder %s26, 0
      %p53 = por %p51, %p52
      %s55 = sadd.s32 %s54, 1
      %p58 = scmp.eq.s32.totalorder %s20, 1
      %p59 = scmp.ne.s32.totalorder %s54, %s56
      %p60 = scmp.eq.s32.totalorder %s20, 0
      %p61 = por %p59, %p60
      %p62 = scmp.ne.s32.totalorder %s54, %s56
      %p63 = scmp.eq.s32.totalorder %s25, 1
      %p64 = por %p62, %p63
      %p65 = scmp.ne.s32.totalorder %s56, %s57
      %p66 = scmp.eq.s32.totalorder %s25, 0
      %p67 = por %p65, %p66
      %p68 = scmp.ne.s32.totalorder %s56, %s57
      %p69 = scmp.eq.s32.totalorder %s26, 1
      %p70 = por %p68, %p69
      %p72 = scmp.ne.s32.totalorder %s57, %s71
      %p73 = scmp.eq.s32.totalorder %s26, 0
      %p74 = por %p72, %p73
      %s76 = sadd.s32 %s75, 1
      %p79 = scmp.eq.s32.totalorder %s20, 1
      %p80 = scmp.ne.s32.totalorder %s75, %s77
      %p81 = scmp.eq.s32.totalorder %s20, 0
      %p82 = por %p80, %p81
      %p83 = scmp.ne.s32.totalorder %s75, %s77
      %p84 = scmp.eq.s32.totalorder %s25, 1
      %p85 = por %p83, %p84
      %p86 = scmp.ne.s32.totalorder %s77, %s78
      %p87 = scmp.eq.s32.totalorder %s25, 0
      %p88 = por %p86, %p87
      %p89 = scmp.ne.s32.totalorder %s77, %s78
      %p90 = scmp.eq.s32.totalorder %s26, 1
      %p91 = por %p89, %p90
      %p93 = scmp.ne.s32.totalorder %s78, %s92
      %p94 = scmp.eq.s32.totalorder %s26, 0
      %p95 = por %p93, %p94
      %s97 = sadd.s32 %s96, 1
      %p100 = scmp.eq.s32.totalorder %s20, 1
      %p101 = scmp.ne.s32.totalorder %s96, %s98
      %p102 = scmp.eq.s32.totalorder %s20, 0
      %p103 = por %p101, %p102
      %p104 = scmp.ne.s32.totalorder %s96, %s98
      %p105 = scmp.eq.s32.totalorder %s25, 1
      %p106 = por %p104, %p105
      %p107 = scmp.ne.s32.totalorder %s98, %s99
      %p108 = scmp.eq.s32.totalorder %s25, 0
      %p109 = por %p107, %p108
      %p110 = scmp.ne.s32.totalorder %s98, %s99
      %p111 = scmp.eq.s32.totalorder %s26, 1
      %p112 = por %p110, %p111
      %p114 = scmp.ne.s32.totalorder %s99, %s113
      %p115 = scmp.eq.s32.totalorder %s26, 0
      %p116 = por %p114, %p115
      %s118 = sadd.s32 %s117, 1
      %p121 = scmp.eq.s32.totalorder %s20, 1
      %p122 = scmp.ne.s32.totalorder %s117, %s119
      %p123 = scmp.eq.s32.totalorder %s20, 0
      %p124 = por %p122, %p123
      %p125 = scmp.ne.s32.totalorder %s117, %s119
      %p126 = scmp.eq.s32.totalorder %s25, 1
      %p127 = por %p125, %p126
      %p128 = scmp.ne.s32.totalorder %s119, %s120
      %p129 = scmp.eq.s32.totalorder %s25, 0
      %p130 = por %p128, %p129
      %p131 = scmp.ne.s32.totalorder %s119, %s120
      %p132 = scmp.eq.s32.totalorder %s26, 1
      %p133 = por %p131, %p132
      %p135 = scmp.ne.s32.totalorder %s120, %s134
      %p136 = scmp.eq.s32.totalorder %s26, 0
      %p137 = por %p135, %p136
      %s139 = sadd.s32 %s138, 1
      %p142 = scmp.eq.s32.totalorder %s20, 1
      %p143 = scmp.ne.s32.totalorder %s138, %s140
      %p144 = scmp.eq.s32.totalorder %s20, 0
      %p145 = por %p143, %p144
      %p146 = scmp.ne.s32.totalorder %s138, %s140
      %p147 = scmp.eq.s32.totalorder %s25, 1
      %p148 = por %p146, %p147
      %p149 = scmp.ne.s32.totalorder %s140, %s141
      %p150 = scmp.eq.s32.totalorder %s25, 0
      %p151 = por %p149, %p150
      %p152 = scmp.ne.s32.totalorder %s140, %s141
      %p153 = scmp.eq.s32.totalorder %s26, 1
      %p154 = por %p152, %p153
      %p156 = scmp.ne.s32.totalorder %s141, %s155
      %p157 = scmp.eq.s32.totalorder %s26, 0
      %p158 = por %p156, %p157
      %s160 = sadd.s32 %s159, 1
      %p163 = scmp.eq.s32.totalorder %s20, 1
      %p164 = scmp.ne.s32.totalorder %s159, %s161
      %p165 = scmp.eq.s32.totalorder %s20, 0
      %p166 = por %p164, %p165
      %p167 = scmp.ne.s32.totalorder %s159, %s161
      %p168 = scmp.eq.s32.totalorder %s25, 1
      %p169 = por %p167, %p168
      %p170 = scmp.ne.s32.totalorder %s161, %s162
      %p171 = scmp.eq.s32.totalorder %s25, 0
      %p172 = por %p170, %p171
      %p173 = scmp.ne.s32.totalorder %s161, %s162
      %p174 = scmp.eq.s32.totalorder %s26, 1
      %p175 = por %p173, %p174
      %p177 = scmp.ne.s32.totalorder %s162, %s176
      %p178 = scmp.eq.s32.totalorder %s26, 0
      %p179 = por %p177, %p178
      %s181 = sadd.s32 %s180, 1
      %p184 = scmp.eq.s32.totalorder %s20, 1
      %p185 = scmp.ne.s32.totalorder %s180, %s182
      %p186 = scmp.eq.s32.totalorder %s20, 0
      %p187 = por %p185, %p186
      %p188 = scmp.ne.s32.totalorder %s180, %s182
      %p189 = scmp.eq.s32.totalorder %s25, 1
      %p190 = por %p188, %p189
      %p191 = scmp.ne.s32.totalorder %s182, %s183
      %p192 = scmp.eq.s32.totalorder %s25, 0
      %p193 = por %p191, %p192
      %p194 = scmp.ne.s32.totalorder %s182, %s183
      %p195 = scmp.eq.s32.totalorder %s26, 1
      %p196 = por %p194, %p195
      %p198 = scmp.ne.s32.totalorder %s183, %s197
      %p199 = scmp.eq.s32.totalorder %s26, 0
      %p200 = por %p198, %p199
      %s202 = sadd.s32 %s201, 1
      %p205 = scmp.eq.s32.totalorder %s20, 1
      %p206 = scmp.ne.s32.totalorder %s201, %s203
      %p207 = scmp.eq.s32.totalorder %s20, 0
      %p208 = por %p206, %p207
      %p209 = scmp.ne.s32.totalorder %s201, %s203
      %p210 = scmp.eq.s32.totalorder %s25, 1
      %p211 = por %p209, %p210
      %p212 = scmp.ne.s32.totalorder %s203, %s204
      %p213 = scmp.eq.s32.totalorder %s25, 0
      %p214 = por %p212, %p213
      %p215 = scmp.ne.s32.totalorder %s203, %s204
      %p216 = scmp.eq.s32.totalorder %s26, 1
      %p217 = por %p215, %p216
      %p219 = scmp.ne.s32.totalorder %s204, %s218
      %p220 = scmp.eq.s32.totalorder %s26, 0
      %p221 = por %p219, %p220
      %s223 = sadd.s32 %s222, 1
      %p226 = scmp.eq.s32.totalorder %s20, 1
      %p227 = scmp.ne.s32.totalorder %s222, %s224
      %p228 = scmp.eq.s32.totalorder %s20, 0
      %p229 = por %p227, %p228
      %p230 = scmp.ne.s32.totalorder %s222, %s224
      %p231 = scmp.eq.s32.totalorder %s25, 1
      %p232 = por %p230, %p231
      %p233 = scmp.ne.s32.totalorder %s224, %s225
      %p234 = scmp.eq.s32.totalorder %s25, 0
      %p235 = por %p233, %p234
      %p236 = scmp.ne.s32.totalorder %s224, %s225
      %p237 = scmp.eq.s32.totalorder %s26, 1
      %p238 = por %p236, %p237
      %p240 = scmp.ne.s32.totalorder %s225, %s239
      %p241 = scmp.eq.s32.totalorder %s26, 0
      %p242 = por %p240, %p241
      %s244 = sadd.s32 %s243, 1
      %p247 = scmp.eq.s32.totalorder %s20, 1
      %p248 = scmp.ne.s32.totalorder %s243, %s245
      %p249 = scmp.eq.s32.totalorder %s20, 0
      %p250 = por %p248, %p249
      %p251 = scmp.ne.s32.totalorder %s243, %s245
      %p252 = scmp.eq.s32.totalorder %s25, 1
      %p253 = por %p251, %p252
      %p254 = scmp.ne.s32.totalorder %s245, %s246
      %p255 = scmp.eq.s32.totalorder %s25, 0
      %p256 = por %p254, %p255
      %p257 = scmp.ne.s32.totalorder %s245, %s246
      %p258 = scmp.eq.s32.totalorder %s26, 1
      %p259 = por %p257, %p258
      %p261 = scmp.ne.s32.totalorder %s246, %s260
      %p262 = scmp.eq.s32.totalorder %s26, 0
      %p263 = por %p261, %p262
      %s264 = ssub.s32 %s20, %s27
      %p265 = scmp.eq.s32.totalorder %s264, 0
      %s267 = sadd.s32 %s266, 1
      %s268 = scalar_select %p265, %s266, %s267
      %p271 = pneg %p265
      %p272 = scmp.eq.s32.totalorder %s20, 1
      %p273 = por %p271, %p272
      %p274 = scmp.ne.s32.totalorder %s266, %s269
      %p275 = scmp.eq.s32.totalorder %s20, 0
      %p276 = por %p274, %p275
      %p277 = scmp.ne.s32.totalorder %s266, %s269
      %p278 = scmp.eq.s32.totalorder %s25, 1
      %p279 = por %p277, %p278
      %p280 = scmp.ne.s32.totalorder %s269, %s270
      %p281 = scmp.eq.s32.totalorder %s25, 0
      %p282 = por %p280, %p281
      %p283 = scmp.ne.s32.totalorder %s269, %s270
      %p284 = scmp.eq.s32.totalorder %s26, 1
      %p285 = por %p283, %p284
      %p287 = scmp.ne.s32.totalorder %s270, %s286
      %p288 = scmp.eq.s32.totalorder %s26, 0
      %p289 = por %p287, %p288
      %p290 = scmp.le.s32.totalorder 1, %s20
      %p291 = scmp.lt.s32.totalorder %s20, 3
      %p292 = pnand %p290, %p291
      %p293 = pneg %p292
      // Predicated region
      $region9: #{trick_model_forward.1} parent=5 // pred_check
        _
      $region10: #{trick_model_forward.1} parent=5 // pred_check_branch
        %295 = sbr.rel (%p292) target = $region12
      $region11: #{trick_model_forward.1} parent=5 // pred_region
        %s296 = ssub.s32 %s20, 1
        // Predicated region
        $region13: #{trick_model_forward.1} parent=11 // pred_check
          %p297 = pneg %p67
        $region14: #{trick_model_forward.1} parent=11 // pred_check_branch
          %299 = sbr.rel (%p297) target = $region16
        $region15: #{trick_model_forward.1} parent=11 // pred_region
          _
        $region16: #{trick_model_forward.1} parent=11 // pred_fallthru
          _
        // Predicated region
        $region17: #{trick_model_forward.1} parent=11 // pred_check
          %p300 = pneg %p88
        $region18: #{trick_model_forward.1} parent=11 // pred_check_branch
          %302 = sbr.rel (%p300) target = $region20
        $region19: #{trick_model_forward.1} parent=11 // pred_region
          _
        $region20: #{trick_model_forward.1} parent=11 // pred_fallthru
          _
        // Predicated region
        $region21: #{trick_model_forward.1} parent=11 // pred_check
          %p303 = pneg %p109
        $region22: #{trick_model_forward.1} parent=11 // pred_check_branch
          %305 = sbr.rel (%p303) target = $region24
        $region23: #{trick_model_forward.1} parent=11 // pred_region
          _
        $region24: #{trick_model_forward.1} parent=11 // pred_fallthru
          _
        // Predicated region
        $region25: #{trick_model_forward.1} parent=11 // pred_check
          %p306 = pneg %p130
        $region26: #{trick_model_forward.1} parent=11 // pred_check_branch
          %308 = sbr.rel (%p306) target = $region28
        $region27: #{trick_model_forward.1} parent=11 // pred_region
          _
        $region28: #{trick_model_forward.1} parent=11 // pred_fallthru
          _
        // Predicated region
        $region29: #{trick_model_forward.1} parent=11 // pred_check
          %p309 = pneg %p151
        $region30: #{trick_model_forward.1} parent=11 // pred_check_branch
          %311 = sbr.rel (%p309) target = $region32
        $region31: #{trick_model_forward.1} parent=11 // pred_region
          _
        $region32: #{trick_model_forward.1} parent=11 // pred_fallthru
          _
        // Predicated region
        $region33: #{trick_model_forward.1} parent=11 // pred_check
          %p312 = pneg %p172
        $region34: #{trick_model_forward.1} parent=11 // pred_check_branch
          %314 = sbr.rel (%p312) target = $region36
        $region35: #{trick_model_forward.1} parent=11 // pred_region
          _
        $region36: #{trick_model_forward.1} parent=11 // pred_fallthru
          _
        // Predicated region
        $region37: #{trick_model_forward.1} parent=11 // pred_check
          %p315 = pneg %p193
        $region38: #{trick_model_forward.1} parent=11 // pred_check_branch
          %317 = sbr.rel (%p315) target = $region40
        $region39: #{trick_model_forward.1} parent=11 // pred_region
          _
        $region40: #{trick_model_forward.1} parent=11 // pred_fallthru
          _
        // Predicated region
        $region41: #{trick_model_forward.1} parent=11 // pred_check
          %p318 = pneg %p214
        $region42: #{trick_model_forward.1} parent=11 // pred_check_branch
          %320 = sbr.rel (%p318) target = $region44
        $region43: #{trick_model_forward.1} parent=11 // pred_region
          _
        $region44: #{trick_model_forward.1} parent=11 // pred_fallthru
          _
        // Predicated region
        $region45: #{trick_model_forward.1} parent=11 // pred_check
          %p321 = pneg %p235
        $region46: #{trick_model_forward.1} parent=11 // pred_check_branch
          %323 = sbr.rel (%p321) target = $region48
        $region47: #{trick_model_forward.1} parent=11 // pred_region
          _
        $region48: #{trick_model_forward.1} parent=11 // pred_fallthru
          _
        // Predicated region
        $region49: #{trick_model_forward.1} parent=11 // pred_check
          %p324 = pneg %p256
        $region50: #{trick_model_forward.1} parent=11 // pred_check_branch
          %326 = sbr.rel (%p324) target = $region52
        $region51: #{trick_model_forward.1} parent=11 // pred_region
          _
        $region52: #{trick_model_forward.1} parent=11 // pred_fallthru
          _
      $region12: #{trick_model_forward.1} parent=5 // pred_fallthru
        _
      %p327 = scmp.lt.s32.totalorder %s20, 2
      // Predicated region
      $region53: #{trick_model_forward.1} parent=5 // pred_check
        %p328 = pneg %p327
      $region54: #{trick_model_forward.1} parent=5 // pred_check_branch
        %330 = sbr.rel (%p328) target = $region56
      $region55: #{trick_model_forward.1} parent=5 // pred_region
        // Predicated region
        $region57: #{trick_model_forward.1} parent=55 // pred_check
          %p331 = pneg %p40
        $region58: #{trick_model_forward.1} parent=55 // pred_check_branch
          %333 = sbr.rel (%p331) target = $region60
        $region59: #{trick_model_forward.1} parent=55 // pred_region
          %p334 = scmp.lt.s32.totalorder %s20, 1
          %s335 = scalar_select %p334, %s20, 1
          %s336 = smul.addr %s335, 18
          %s337 = smul.addr %s336, 8
          %s338 = scalar_lea.vmem %s0, %s337
        $region60: #{trick_model_forward.1} parent=55 // pred_fallthru
          _
      $region56: #{trick_model_forward.1} parent=5 // pred_fallthru
        _
      %p339 = scmp.le.s32.totalorder 1, %s20
      %p340 = scmp.lt.s32.totalorder %s20, 3
      %p341 = pnand %p339, %p340
      %p342 = pneg %p341
      // Predicated region
      $region61: #{trick_model_forward.1} parent=5 // pred_check
        _
      $region62: #{trick_model_forward.1} parent=5 // pred_check_branch
        %344 = sbr.rel (%p341) target = $region64
      $region63: #{trick_model_forward.1} parent=5 // pred_region
        %s345 = ssub.s32 %s20, 1
        %p346 = scmp.lt.s32.totalorder %s25, 1
        %s347 = scalar_select %p346, %s25, 1
        %s348 = smul.addr %s347, 18
        %s349 = smul.addr %s348, 8
        %s350 = scalar_lea.vmem %s0, %s349
        %p351 = pneg %p46
        %p352 = pneg %p43
        %p353 = pneg %p67
        %p354 = pneg %p64
        %p355 = pneg %p88
        %p356 = pneg %p85
        %p357 = pneg %p109
        %p358 = pneg %p106
        %p359 = pneg %p130
        %p360 = pneg %p127
        %p361 = pneg %p151
        %p362 = pneg %p148
        %p363 = pneg %p172
        %p364 = pneg %p169
        %p365 = pneg %p193
        %p366 = pneg %p190
        %p367 = pneg %p214
        %p368 = pneg %p211
        %p369 = pneg %p235
        %p370 = pneg %p232
        %p371 = pneg %p256
        %p372 = pneg %p253
        %p373 = pneg %p282
        %p374 = pneg %p279
        %s375 = sand.u32 %s269, 1
        %s376 = scalar_lea.sflag [#allocation4], %s375
        %s377 = sand.u32 %s269, 1
        %s378 = scalar_lea.vmem [#allocation3], %s377
        %p379 = scmp.lt.s32.totalorder %s25, 1
        %s380 = scalar_select %p379, %s25, 1
        %s381 = smul.addr %s380, 18
        %s382 = smul.addr %s381, 8
        %s383 = scalar_lea.vmem %s0, %s382
        %v385 = vld [vmem:[%s383] sm:$0xff]
        %v386 = vld [vmem:[%s383 + $0x8] sm:$0x1]
        %v387 = vld [vmem:[%s383 + $0x10] sm:$0xff]
        %v388 = vld [vmem:[%s383 + $0x18] sm:$0x1]
        %v389 = vld [vmem:[%s383 + $0x20] sm:$0xff]
        %v390 = vld [vmem:[%s383 + $0x28] sm:$0x1]
        %v391 = vld [vmem:[%s383 + $0x30] sm:$0xff]
        %v392 = vld [vmem:[%s383 + $0x38] sm:$0x1]
        %v393 = vld [vmem:[%s383 + $0x40] sm:$0xff]
        %v394 = vld [vmem:[%s383 + $0x48] sm:$0x1]
        %v395 = vld [vmem:[%s383 + $0x50] sm:$0xff]
        %v396 = vld [vmem:[%s383 + $0x58] sm:$0x1]
        %v397 = vld [vmem:[%s383 + $0x60] sm:$0xff]
        %v398 = vld [vmem:[%s383 + $0x68] sm:$0x1]
        %v399 = vld [vmem:[%s383 + $0x70] sm:$0xff]
        %v400 = vld [vmem:[%s383 + $0x78] sm:$0x1]
        %v401 = vld [vmem:[%s383 + $0x80] sm:$0xff]
        %v402 = vld [vmem:[%s383 + $0x88] sm:$0x1]
        %v403 = vld [vmem:[%s1] sm:$0x7]
        %v404 = vld [vmem:[%s1 + $0x4] sm:$0x7]
        %v405 = vld [vmem:[%s1 + $0x8] sm:$0x7]
        %v406 = vld [vmem:[%s1 + $0xc] sm:$0x7]
        %v407 = vld [vmem:[%s1 + $0x10] sm:$0x7]
        %v408 = vld [vmem:[%s1 + $0x14] sm:$0x7]
        %v409 = vld [vmem:[%s1 + $0x18] sm:$0x7]
        %v410 = vld [vmem:[%s1 + $0x1c] sm:$0x7]
        %v411 = vld [vmem:[%s1 + $0x20] sm:$0x7]
        %v412 = vpack.c.bf16 %v387, %v385
        %v413 = vpack.c.bf16 %v391, %v389
        %v414 = vpack.c.bf16 %v395, %v393
        %v415 = vpack.c.bf16 %v399, %v397
        %v416 = vpack.c.bf16 %v403, %v403
        %v417 = vpack.c.bf16 %v404, %v404
        %422 = vrot.lane.b32.xlu0 %v412, 125
        %v423 = vpop.permute.xlu0 %422
        %424 = vrot.lane.b32.xlu0 %v413, 125
        %v425 = vpop.permute.xlu0 %424
        %426 = vrot.lane.b32.xlu0 %v414, 125
        %v427 = vpop.permute.xlu0 %426
        %428 = vrot.lane.b32.xlu0 %v415, 125
        %v429 = vpop.permute.xlu0 %428
        %vm430 = vcmask 23552
        %v432 = vsel %vm430, %v423, 0
        %v435 = vsel %vm430, %v425, 0
        %v438 = vsel %vm430, %v427, 0
        %v441 = vsel %vm430, %v429, 0
        %vm443 = vcmask 1040384
        %vm444 = vcmask 1041408
        %v445 = vsel %vm443, 4294967295, 65535
        %v446 = vsel %vm444, %v445, 0
        %v448 = vand.u32 %v417, %v446
        %450 = vmatpush.bf16.msra.mxu0 0
        %451 = vmatpush.bf16.msra.mxu0 0
        %452 = vmatpush.bf16.msra.mxu0 0
        %453 = vmatpush.bf16.msra.mxu0 0
        %454 = vmatpush.bf16.msra.mxu0 0
        %455 = vmatpush.bf16.msra.mxu0 0
        %456 = vmatpush.bf16.msra.mxu0 0
        %457 = vmatpush.bf16.msra.mxu0 %v448
        %458 = vmatmul.bf16.gmra.mxu0 %v432
        %v459 = vpop.f32.mrf.mxu0
        %v460 = vadd.f32 0.0, %v459
        %v461 = vpop.f32.mrf.mxu0
        %v462 = vadd.f32 0.0, %v461
        %463 = vmatmul.bf16.gmra.mxu0 %v435
        %v464 = vpop.f32.mrf.mxu0
        %v465 = vadd.f32 0.0, %v464
        %v466 = vpop.f32.mrf.mxu0
        %v467 = vadd.f32 0.0, %v466
        %468 = vmatmul.bf16.gmra.mxu0 %v438
        %v469 = vpop.f32.mrf.mxu0
        %v470 = vadd.f32 0.0, %v469
        %v471 = vpop.f32.mrf.mxu0
        %v472 = vadd.f32 0.0, %v471
        %473 = vmatmul.bf16.gmra.mxu0 %v441
        %v474 = vpop.f32.mrf.mxu0
        %v475 = vadd.f32 0.0, %v474
        %v476 = vpop.f32.mrf.mxu0
        %v477 = vadd.f32 0.0, %v476
        %478 = vdwg.mxu0
        %v480 = vsel %vm430, %v412, 0
        %v483 = vsel %vm430, %v413, 0
        %v486 = vsel %vm430, %v414, 0
        %v489 = vsel %vm430, %v415, 0
        %v492 = vand.u32 %v416, %v446
        %494 = vmatpush.bf16.msra.mxu0 0
        %495 = vmatpush.bf16.msra.mxu0 0
        %496 = vmatpush.bf16.msra.mxu0 0
        %497 = vmatpush.bf16.msra.mxu0 0
        %498 = vmatpush.bf16.msra.mxu0 0
        %499 = vmatpush.bf16.msra.mxu0 0
        %500 = vmatpush.bf16.msra.mxu0 0
        %501 = vmatpush.bf16.msra.mxu0 %v492
        %502 = vmatmul.bf16.gmra.mxu0 %v480
        %v503 = vpop.f32.mrf.mxu0
        %v504 = vadd.f32 %v460, %v503
        %v505 = vpop.f32.mrf.mxu0
        %v506 = vadd.f32 %v462, %v505
        %507 = vmatmul.bf16.gmra.mxu0 %v483
        %v508 = vpop.f32.mrf.mxu0
        %v509 = vadd.f32 %v465, %v508
        %v510 = vpop.f32.mrf.mxu0
        %v511 = vadd.f32 %v467, %v510
        %512 = vmatmul.bf16.gmra.mxu0 %v486
        %v513 = vpop.f32.mrf.mxu0
        %v514 = vadd.f32 %v470, %v513
        %v515 = vpop.f32.mrf.mxu0
        %v516 = vadd.f32 %v472, %v515
        %517 = vmatmul.bf16.gmra.mxu0 %v489
        %v518 = vpop.f32.mrf.mxu0
        %v519 = vadd.f32 %v475, %v518
        %v520 = vpop.f32.mrf.mxu0
        %v521 = vadd.f32 %v477, %v520
        %522 = vdwg.mxu0
        %vm539 = vcmask 1046528
        %v540 = vrot.slane %v385, 1
        %v541 = vrot.slane %v386, 1
        %v542 = vsel %vm539, %v540, %v541
        %v543 = vrot.slane %v387, 1
        %v544 = vrot.slane %v388, 1
        %v545 = vsel %vm539, %v543, %v544
        %v546 = vrot.slane %v389, 1
        %v547 = vrot.slane %v390, 1
        %v548 = vsel %vm539, %v546, %v547
        %v549 = vrot.slane %v391, 1
        %v550 = vrot.slane %v392, 1
        %v551 = vsel %vm539, %v549, %v550
        %v552 = vrot.slane %v393, 1
        %v553 = vrot.slane %v394, 1
        %v554 = vsel %vm539, %v552, %v553
        %v555 = vrot.slane %v395, 1
        %v556 = vrot.slane %v396, 1
        %v557 = vsel %vm539, %v555, %v556
        %v558 = vrot.slane %v397, 1
        %v559 = vrot.slane %v398, 1
        %v560 = vsel %vm539, %v558, %v559
        %v561 = vrot.slane %v399, 1
        %v562 = vrot.slane %v400, 1
        %v563 = vsel %vm539, %v561, %v562
        %v572 = vpack.c.bf16 %v545, %v542
        %v573 = vpack.c.bf16 %v551, %v548
        %v574 = vpack.c.bf16 %v557, %v554
        %v575 = vpack.c.bf16 %v563, %v560
        %v576 = vpack.c.bf16 %v405, %v405
        %v578 = vsel %vm430, %v572, 0
        %v581 = vsel %vm430, %v573, 0
        %v584 = vsel %vm430, %v574, 0
        %v587 = vsel %vm430, %v575, 0
        %v590 = vand.u32 %v576, %v446
        %592 = vmatpush.bf16.msra.mxu0 0
        %593 = vmatpush.bf16.msra.mxu0 0
        %594 = vmatpush.bf16.msra.mxu0 0
        %595 = vmatpush.bf16.msra.mxu0 0
        %596 = vmatpush.bf16.msra.mxu0 0
        %597 = vmatpush.bf16.msra.mxu0 0
        %598 = vmatpush.bf16.msra.mxu0 0
        %599 = vmatpush.bf16.msra.mxu0 %v590
        %600 = vmatmul.bf16.gmra.mxu0 %v578
        %v601 = vpop.f32.mrf.mxu0
        %v602 = vadd.f32 0.0, %v601
        %v603 = vpop.f32.mrf.mxu0
        %v604 = vadd.f32 0.0, %v603
        %605 = vmatmul.bf16.gmra.mxu0 %v581
        %v606 = vpop.f32.mrf.mxu0
        %v607 = vadd.f32 0.0, %v606
        %v608 = vpop.f32.mrf.mxu0
        %v609 = vadd.f32 0.0, %v608
        %610 = vmatmul.bf16.gmra.mxu0 %v584
        %v611 = vpop.f32.mrf.mxu0
        %v612 = vadd.f32 0.0, %v611
        %v613 = vpop.f32.mrf.mxu0
        %v614 = vadd.f32 0.0, %v613
        %615 = vmatmul.bf16.gmra.mxu0 %v587
        %v616 = vpop.f32.mrf.mxu0
        %v617 = vadd.f32 0.0, %v616
        %v618 = vpop.f32.mrf.mxu0
        %v619 = vadd.f32 0.0, %v618
        %620 = vdwg.mxu0
        %v621 = vadd.f32 %v504, %v602
        %v622 = vadd.f32 %v506, %v604
        %v623 = vadd.f32 %v509, %v607
        %v624 = vadd.f32 %v511, %v609
        %v625 = vadd.f32 %v514, %v612
        %v626 = vadd.f32 %v516, %v614
        %v627 = vadd.f32 %v519, %v617
        %v628 = vadd.f32 %v521, %v619
        %v629 = vpack.c.bf16 %v406, %v406
        %630 = vrot.lane.b32.xlu0 %v412, 122
        %v631 = vpop.permute.xlu0 %630
        %632 = vrot.lane.b32.xlu0 %v413, 122
        %v633 = vpop.permute.xlu0 %632
        %634 = vrot.lane.b32.xlu0 %v414, 122
        %v635 = vpop.permute.xlu0 %634
        %636 = vrot.lane.b32.xlu0 %v415, 122
        %v637 = vpop.permute.xlu0 %636
        %v639 = vsel %vm430, %v631, 0
        %v642 = vsel %vm430, %v633, 0
        %v645 = vsel %vm430, %v635, 0
        %v648 = vsel %vm430, %v637, 0
        %v651 = vand.u32 %v629, %v446
        %653 = vmatpush.bf16.msra.mxu0 0
        %654 = vmatpush.bf16.msra.mxu0 0
        %655 = vmatpush.bf16.msra.mxu0 0
        %656 = vmatpush.bf16.msra.mxu0 0
        %657 = vmatpush.bf16.msra.mxu0 0
        %658 = vmatpush.bf16.msra.mxu0 0
        %659 = vmatpush.bf16.msra.mxu0 0
        %660 = vmatpush.bf16.msra.mxu0 %v651
        %661 = vmatmul.bf16.gmra.mxu0 %v639
        %v662 = vpop.f32.mrf.mxu0
        %v663 = vadd.f32 0.0, %v662
        %v664 = vpop.f32.mrf.mxu0
        %v665 = vadd.f32 0.0, %v664
        %666 = vmatmul.bf16.gmra.mxu0 %v642
        %v667 = vpop.f32.mrf.mxu0
        %v668 = vadd.f32 0.0, %v667
        %v669 = vpop.f32.mrf.mxu0
        %v670 = vadd.f32 0.0, %v669
        %671 = vmatmul.bf16.gmra.mxu0 %v645
        %v672 = vpop.f32.mrf.mxu0
        %v673 = vadd.f32 0.0, %v672
        %v674 = vpop.f32.mrf.mxu0
        %v675 = vadd.f32 0.0, %v674
        %676 = vmatmul.bf16.gmra.mxu0 %v648
        %v677 = vpop.f32.mrf.mxu0
        %v678 = vadd.f32 0.0, %v677
        %v679 = vpop.f32.mrf.mxu0
        %v680 = vadd.f32 0.0, %v679
        %681 = vdwg.mxu0
        %v682 = vadd.f32 %v621, %v663
        %v683 = vadd.f32 %v622, %v665
        %v684 = vadd.f32 %v623, %v668
        %v685 = vadd.f32 %v624, %v670
        %v686 = vadd.f32 %v625, %v673
        %v687 = vadd.f32 %v626, %v675
        %v688 = vadd.f32 %v627, %v678
        %v689 = vadd.f32 %v628, %v680
        %v690 = vpack.c.bf16 %v407, %v407
        %691 = vrot.lane.b32.xlu0 %v412, 119
        %v692 = vpop.permute.xlu0 %691
        %693 = vrot.lane.b32.xlu0 %v413, 119
        %v694 = vpop.permute.xlu0 %693
        %695 = vrot.lane.b32.xlu0 %v414, 119
        %v696 = vpop.permute.xlu0 %695
        %697 = vrot.lane.b32.xlu0 %v415, 119
        %v698 = vpop.permute.xlu0 %697
        %v700 = vsel %vm430, %v692, 0
        %v703 = vsel %vm430, %v694, 0
        %v706 = vsel %vm430, %v696, 0
        %v709 = vsel %vm430, %v698, 0
        %v712 = vand.u32 %v690, %v446
        %714 = vmatpush.bf16.msra.mxu0 0
        %715 = vmatpush.bf16.msra.mxu0 0
        %716 = vmatpush.bf16.msra.mxu0 0
        %717 = vmatpush.bf16.msra.mxu0 0
        %718 = vmatpush.bf16.msra.mxu0 0
        %719 = vmatpush.bf16.msra.mxu0 0
        %720 = vmatpush.bf16.msra.mxu0 0
        %721 = vmatpush.bf16.msra.mxu0 %v712
        %722 = vmatmul.bf16.gmra.mxu0 %v700
        %v723 = vpop.f32.mrf.mxu0
        %v724 = vadd.f32 0.0, %v723
        %v725 = vpop.f32.mrf.mxu0
        %v726 = vadd.f32 0.0, %v725
        %727 = vmatmul.bf16.gmra.mxu0 %v703
        %v728 = vpop.f32.mrf.mxu0
        %v729 = vadd.f32 0.0, %v728
        %v730 = vpop.f32.mrf.mxu0
        %v731 = vadd.f32 0.0, %v730
        %732 = vmatmul.bf16.gmra.mxu0 %v706
        %v733 = vpop.f32.mrf.mxu0
        %v734 = vadd.f32 0.0, %v733
        %v735 = vpop.f32.mrf.mxu0
        %v736 = vadd.f32 0.0, %v735
        %737 = vmatmul.bf16.gmra.mxu0 %v709
        %v738 = vpop.f32.mrf.mxu0
        %v739 = vadd.f32 0.0, %v738
        %v740 = vpop.f32.mrf.mxu0
        %v741 = vadd.f32 0.0, %v740
        %742 = vdwg.mxu0
        %v743 = vadd.f32 %v682, %v724
        %v744 = vadd.f32 %v683, %v726
        %v745 = vadd.f32 %v684, %v729
        %v746 = vadd.f32 %v685, %v731
        %v747 = vadd.f32 %v686, %v734
        %v748 = vadd.f32 %v687, %v736
        %v749 = vadd.f32 %v688, %v739
        %v750 = vadd.f32 %v689, %v741
        %v751 = vpack.c.bf16 %v408, %v408
        %756 = vrot.lane.b32.xlu0 %v572, 122
        %v757 = vpop.permute.xlu0 %756
        %758 = vrot.lane.b32.xlu0 %v573, 122
        %v759 = vpop.permute.xlu0 %758
        %760 = vrot.lane.b32.xlu0 %v574, 122
        %v761 = vpop.permute.xlu0 %760
        %762 = vrot.lane.b32.xlu0 %v575, 122
        %v763 = vpop.permute.xlu0 %762
        %v765 = vsel %vm430, %v757, 0
        %v768 = vsel %vm430, %v759, 0
        %v771 = vsel %vm430, %v761, 0
        %v774 = vsel %vm430, %v763, 0
        %v777 = vand.u32 %v751, %v446
        %779 = vmatpush.bf16.msra.mxu0 0
        %780 = vmatpush.bf16.msra.mxu0 0
        %781 = vmatpush.bf16.msra.mxu0 0
        %782 = vmatpush.bf16.msra.mxu0 0
        %783 = vmatpush.bf16.msra.mxu0 0
        %784 = vmatpush.bf16.msra.mxu0 0
        %785 = vmatpush.bf16.msra.mxu0 0
        %786 = vmatpush.bf16.msra.mxu0 %v777
        %787 = vmatmul.bf16.gmra.mxu0 %v765
        %v788 = vpop.f32.mrf.mxu0
        %v789 = vadd.f32 0.0, %v788
        %v790 = vpop.f32.mrf.mxu0
        %v791 = vadd.f32 0.0, %v790
        %792 = vmatmul.bf16.gmra.mxu0 %v768
        %v793 = vpop.f32.mrf.mxu0
        %v794 = vadd.f32 0.0, %v793
        %v795 = vpop.f32.mrf.mxu0
        %v796 = vadd.f32 0.0, %v795
        %797 = vmatmul.bf16.gmra.mxu0 %v771
        %v798 = vpop.f32.mrf.mxu0
        %v799 = vadd.f32 0.0, %v798
        %v800 = vpop.f32.mrf.mxu0
        %v801 = vadd.f32 0.0, %v800
        %802 = vmatmul.bf16.gmra.mxu0 %v774
        %v803 = vpop.f32.mrf.mxu0
        %v804 = vadd.f32 0.0, %v803
        %v805 = vpop.f32.mrf.mxu0
        %v806 = vadd.f32 0.0, %v805
        %807 = vdwg.mxu0
        %v808 = vadd.f32 %v743, %v789
        %v809 = vadd.f32 %v744, %v791
        %v810 = vadd.f32 %v745, %v794
        %v811 = vadd.f32 %v746, %v796
        %v812 = vadd.f32 %v747, %v799
        %v813 = vadd.f32 %v748, %v801
        %v814 = vadd.f32 %v749, %v804
        %v815 = vadd.f32 %v750, %v806
        %v816 = vpack.c.bf16 %v389, %v387
        %v817 = vpack.c.bf16 %v393, %v391
        %v818 = vpack.c.bf16 %v397, %v395
        %v819 = vpack.c.bf16 %v401, %v399
        %v820 = vpack.c.bf16 %v409, %v409
        %v822 = vsel %vm430, %v816, 0
        %v825 = vsel %vm430, %v817, 0
        %v828 = vsel %vm430, %v818, 0
        %v831 = vsel %vm430, %v819, 0
        %v834 = vand.u32 %v820, %v446
        %836 = vmatpush.bf16.msra.mxu0 0
        %837 = vmatpush.bf16.msra.mxu0 0
        %838 = vmatpush.bf16.msra.mxu0 0
        %839 = vmatpush.bf16.msra.mxu0 0
        %840 = vmatpush.bf16.msra.mxu0 0
        %841 = vmatpush.bf16.msra.mxu0 0
        %842 = vmatpush.bf16.msra.mxu0 0
        %843 = vmatpush.bf16.msra.mxu0 %v834
        %844 = vmatmul.bf16.gmra.mxu0 %v822
        %v845 = vpop.f32.mrf.mxu0
        %v846 = vadd.f32 0.0, %v845
        %v847 = vpop.f32.mrf.mxu0
        %v848 = vadd.f32 0.0, %v847
        %849 = vmatmul.bf16.gmra.mxu0 %v825
        %v850 = vpop.f32.mrf.mxu0
        %v851 = vadd.f32 0.0, %v850
        %v852 = vpop.f32.mrf.mxu0
        %v853 = vadd.f32 0.0, %v852
        %854 = vmatmul.bf16.gmra.mxu0 %v828
        %v855 = vpop.f32.mrf.mxu0
        %v856 = vadd.f32 0.0, %v855
        %v857 = vpop.f32.mrf.mxu0
        %v858 = vadd.f32 0.0, %v857
        %859 = vmatmul.bf16.gmra.mxu0 %v831
        %v860 = vpop.f32.mrf.mxu0
        %v861 = vadd.f32 0.0, %v860
        %v862 = vpop.f32.mrf.mxu0
        %v863 = vadd.f32 0.0, %v862
        %864 = vdwg.mxu0
        %v865 = vadd.f32 %v808, %v846
        %v866 = vadd.f32 %v809, %v848
        %v867 = vadd.f32 %v810, %v851
        %v868 = vadd.f32 %v811, %v853
        %v869 = vadd.f32 %v812, %v856
        %v870 = vadd.f32 %v813, %v858
        %v871 = vadd.f32 %v814, %v861
        %v872 = vadd.f32 %v815, %v863
        %v873 = vpack.c.bf16 %v410, %v410
        %878 = vrot.lane.b32.xlu0 %v816, 125
        %v879 = vpop.permute.xlu0 %878
        %880 = vrot.lane.b32.xlu0 %v817, 125
        %v881 = vpop.permute.xlu0 %880
        %882 = vrot.lane.b32.xlu0 %v818, 125
        %v883 = vpop.permute.xlu0 %882
        %884 = vrot.lane.b32.xlu0 %v819, 125
        %v885 = vpop.permute.xlu0 %884
        %v887 = vsel %vm430, %v879, 0
        %v890 = vsel %vm430, %v881, 0
        %v893 = vsel %vm430, %v883, 0
        %v896 = vsel %vm430, %v885, 0
        %v899 = vand.u32 %v873, %v446
        %901 = vmatpush.bf16.msra.mxu0 0
        %902 = vmatpush.bf16.msra.mxu0 0
        %903 = vmatpush.bf16.msra.mxu0 0
        %904 = vmatpush.bf16.msra.mxu0 0
        %905 = vmatpush.bf16.msra.mxu0 0
        %906 = vmatpush.bf16.msra.mxu0 0
        %907 = vmatpush.bf16.msra.mxu0 0
        %908 = vmatpush.bf16.msra.mxu0 %v899
        %909 = vmatmul.bf16.gmra.mxu0 %v887
        %v910 = vpop.f32.mrf.mxu0
        %v911 = vadd.f32 0.0, %v910
        %v912 = vpop.f32.mrf.mxu0
        %v913 = vadd.f32 0.0, %v912
        %914 = vmatmul.bf16.gmra.mxu0 %v890
        %v915 = vpop.f32.mrf.mxu0
        %v916 = vadd.f32 0.0, %v915
        %v917 = vpop.f32.mrf.mxu0
        %v918 = vadd.f32 0.0, %v917
        %919 = vmatmul.bf16.gmra.mxu0 %v893
        %v920 = vpop.f32.mrf.mxu0
        %v921 = vadd.f32 0.0, %v920
        %v922 = vpop.f32.mrf.mxu0
        %v923 = vadd.f32 0.0, %v922
        %924 = vmatmul.bf16.gmra.mxu0 %v896
        %v925 = vpop.f32.mrf.mxu0
        %v926 = vadd.f32 0.0, %v925
        %v927 = vpop.f32.mrf.mxu0
        %v928 = vadd.f32 0.0, %v927
        %929 = vdwg.mxu0
        %v930 = vadd.f32 %v865, %v911
        %v931 = vadd.f32 %v866, %v913
        %v932 = vadd.f32 %v867, %v916
        %v933 = vadd.f32 %v868, %v918
        %v934 = vadd.f32 %v869, %v921
        %v935 = vadd.f32 %v870, %v923
        %v936 = vadd.f32 %v871, %v926
        %v937 = vadd.f32 %v872, %v928
        %v940 = vrot.slane %v401, 1
        %v941 = vrot.slane %v402, 1
        %v942 = vsel %vm539, %v940, %v941
        %v944 = vpack.c.bf16 %v548, %v545
        %v945 = vpack.c.bf16 %v554, %v551
        %v946 = vpack.c.bf16 %v560, %v557
        %v947 = vpack.c.bf16 %v942, %v563
        %v948 = vpack.c.bf16 %v411, %v411
        %v950 = vsel %vm430, %v944, 0
        %v953 = vsel %vm430, %v945, 0
        %v956 = vsel %vm430, %v946, 0
        %v959 = vsel %vm430, %v947, 0
        %v962 = vand.u32 %v948, %v446
        %964 = vmatpush.bf16.msra.mxu0 0
        %965 = vmatpush.bf16.msra.mxu0 0
        %966 = vmatpush.bf16.msra.mxu0 0
        %967 = vmatpush.bf16.msra.mxu0 0
        %968 = vmatpush.bf16.msra.mxu0 0
        %969 = vmatpush.bf16.msra.mxu0 0
        %970 = vmatpush.bf16.msra.mxu0 0
        %971 = vmatpush.bf16.msra.mxu0 %v962
        %972 = vmatmul.bf16.gmra.mxu0 %v950
        %v973 = vpop.f32.mrf.mxu0
        %v974 = vadd.f32 0.0, %v973
        %v975 = vpop.f32.mrf.mxu0
        %v976 = vadd.f32 0.0, %v975
        %977 = vmatmul.bf16.gmra.mxu0 %v953
        %v978 = vpop.f32.mrf.mxu0
        %v979 = vadd.f32 0.0, %v978
        %v980 = vpop.f32.mrf.mxu0
        %v981 = vadd.f32 0.0, %v980
        %982 = vmatmul.bf16.gmra.mxu0 %v956
        %v983 = vpop.f32.mrf.mxu0
        %v984 = vadd.f32 0.0, %v983
        %v985 = vpop.f32.mrf.mxu0
        %v986 = vadd.f32 0.0, %v985
        %987 = vmatmul.bf16.gmra.mxu0 %v959
        %v988 = vpop.f32.mrf.mxu0
        %v989 = vadd.f32 0.0, %v988
        %v990 = vpop.f32.mrf.mxu0
        %v991 = vadd.f32 0.0, %v990
        %992 = vdwg.mxu0
        %v993 = vadd.f32 %v930, %v974
        %v994 = vadd.f32 %v931, %v976
        %v995 = vadd.f32 %v932, %v979
        %v996 = vadd.f32 %v933, %v981
        %v997 = vadd.f32 %v934, %v984
        %v998 = vadd.f32 %v935, %v986
        %v999 = vadd.f32 %v936, %v989
        %v1000 = vadd.f32 %v937, %v991
        %v1001 = vld [vmem:[%s2] sm:$0x1]
        %v1003 = vperm.slane %v1001, 0
        %v1005 = vadd.f32 %v993, %v1003
        %v1006 = vadd.f32 %v994, %v1003
        %v1007 = vadd.f32 %v995, %v1003
        %v1008 = vadd.f32 %v996, %v1003
        %v1009 = vadd.f32 %v997, %v1003
        %v1010 = vadd.f32 %v998, %v1003
        %v1011 = vadd.f32 %v999, %v1003
        %v1012 = vadd.f32 %v1000, %v1003
        %v1013 = vmax.f32 %v1005, 0.0
        %v1014 = vmax.f32 %v1006, 0.0
        %v1015 = vmax.f32 %v1007, 0.0
        %v1016 = vmax.f32 %v1008, 0.0
        %v1017 = vmax.f32 %v1009, 0.0
        %v1018 = vmax.f32 %v1010, 0.0
        %v1019 = vmax.f32 %v1011, 0.0
        %v1020 = vmax.f32 %v1012, 0.0
        %v1021 = vmin.f32 %v1013, 6.0
        %v1022 = vmin.f32 %v1014, 6.0
        %v1023 = vmin.f32 %v1015, 6.0
        %v1024 = vmin.f32 %v1016, 6.0
        %v1025 = vmin.f32 %v1017, 6.0
        %v1026 = vmin.f32 %v1018, 6.0
        %v1027 = vmin.f32 %v1019, 6.0
        %v1028 = vmin.f32 %v1020, 6.0
        %v1029 = vpack.c.bf16 %v1022, %v1021
        %v1030 = vpack.c.bf16 %v1024, %v1023
        %v1031 = vpack.c.bf16 %v1026, %v1025
        %v1032 = vpack.c.bf16 %v1028, %v1027
        %v1033 = vld [vmem:[%s3] sm:$0xf]
        %v1034 = vld [vmem:[%s3 + $0x4] sm:$0xf]
        %v1035 = vld [vmem:[%s4] sm:$0x1]
        %v1037 = vperm.slane %v1035, 0
        %v1041 = vunpack.c.l.b16 %v1033
        %v1042 = vunpack.c.l.b16 %v1034
        %v1043 = vpack.c.b16 %v1042, %v1041
        %vm1045 = vcmask 130048
        %v1047 = vsel %vm1045, %v1029, 0
        %v1050 = vsel %vm1045, %v1030, 0
        %v1053 = vsel %vm1045, %v1031, 0
        %v1056 = vsel %vm1045, %v1032, 0
        %1058 = vmatpush.bf16.msra.mxu0 0
        %1059 = vmatpush.bf16.msra.mxu0 0
        %1060 = vmatpush.bf16.msra.mxu0 0
        %1061 = vmatpush.bf16.msra.mxu0 0
        %1062 = vmatpush.bf16.msra.mxu0 0
        %1063 = vmatpush.bf16.msra.mxu0 0
        %1064 = vmatpush.bf16.msra.mxu0 0
        %1065 = vmatpush.bf16.msra.mxu0 %v1043
        %1066 = vmatmul.bf16.gmra.mxu0 %v1047
        %v1067 = vpop.f32.mrf.mxu0
        %v1068 = vadd.f32 %v1037, %v1067
        %v1069 = vpop.f32.mrf.mxu0
        %v1070 = vadd.f32 %v1037, %v1069
        %1071 = vmatmul.bf16.gmra.mxu0 %v1050
        %v1072 = vpop.f32.mrf.mxu0
        %v1073 = vadd.f32 %v1037, %v1072
        %v1074 = vpop.f32.mrf.mxu0
        %v1075 = vadd.f32 %v1037, %v1074
        %1076 = vmatmul.bf16.gmra.mxu0 %v1053
        %v1077 = vpop.f32.mrf.mxu0
        %v1078 = vadd.f32 %v1037, %v1077
        %v1079 = vpop.f32.mrf.mxu0
        %v1080 = vadd.f32 %v1037, %v1079
        %1081 = vmatmul.bf16.gmra.mxu0 %v1056
        %v1082 = vpop.f32.mrf.mxu0
        %v1083 = vadd.f32 %v1037, %v1082
        %v1084 = vpop.f32.mrf.mxu0
        %v1085 = vadd.f32 %v1037, %v1084
        %1086 = vdwg.mxu0
        %v1087 = vmax.f32 %v1068, 0.0
        %v1088 = vmax.f32 %v1070, 0.0
        %v1089 = vmax.f32 %v1073, 0.0
        %v1090 = vmax.f32 %v1075, 0.0
        %v1091 = vmax.f32 %v1078, 0.0
        %v1092 = vmax.f32 %v1080, 0.0
        %v1093 = vmax.f32 %v1083, 0.0
        %v1094 = vmax.f32 %v1085, 0.0
        %v1095 = vmin.f32 %v1087, 6.0
        %v1096 = vmin.f32 %v1088, 6.0
        %v1097 = vmin.f32 %v1089, 6.0
        %v1098 = vmin.f32 %v1090, 6.0
        %v1099 = vmin.f32 %v1091, 6.0
        %v1100 = vmin.f32 %v1092, 6.0
        %v1101 = vmin.f32 %v1093, 6.0
        %v1102 = vmin.f32 %v1094, 6.0
        %vm1103 = vcmask 261120
        %1104 = vst.msk [vmem:[#allocation2] sm:$0xff] %vm1103, 0.0
        %vm1105 = vcmask 254976
        %1106 = vst.msk [vmem:[#allocation2 + $0x8] sm:$0x3] %vm1105, 0.0
        %s1107 = scalar_lea.vmem [#allocation2], 144
        %1108 = vst.msk [vmem:[%s1107] sm:$0xff] %vm1103, 0.0
        %1109 = vst.msk [vmem:[%s1107 + $0x8] sm:$0x3] %vm1105, 0.0
        %s1110 = scalar_lea.vmem [#allocation2], 16
        %vm1111 = vcmask 253952
        %1112 = vst.msk [vmem:[%s1110] sm:$0x1] %vm1111, 0.0
        %1113 = vst.msk [vmem:[%s1110 + $0x10] sm:$0x1] %vm1111, 0.0
        %1114 = vst.msk [vmem:[%s1110 + $0x20] sm:$0x1] %vm1111, 0.0
        %1115 = vst.msk [vmem:[%s1110 + $0x30] sm:$0x1] %vm1111, 0.0
        %1116 = vst.msk [vmem:[%s1110 + $0x40] sm:$0x1] %vm1111, 0.0
        %1117 = vst.msk [vmem:[%s1110 + $0x50] sm:$0x1] %vm1111, 0.0
        %1118 = vst.msk [vmem:[%s1110 + $0x60] sm:$0x1] %vm1111, 0.0
        %1119 = vst.msk [vmem:[%s1110 + $0x70] sm:$0x1] %vm1111, 0.0
        %1120 = vst.msk [vmem:[%s1110 + $0x9] sm:$0x1] %vm1111, 0.0
        %1121 = vst.msk [vmem:[%s1110 + $0x19] sm:$0x1] %vm1111, 0.0
        %1122 = vst.msk [vmem:[%s1110 + $0x29] sm:$0x1] %vm1111, 0.0
        %1123 = vst.msk [vmem:[%s1110 + $0x39] sm:$0x1] %vm1111, 0.0
        %1124 = vst.msk [vmem:[%s1110 + $0x49] sm:$0x1] %vm1111, 0.0
        %1125 = vst.msk [vmem:[%s1110 + $0x59] sm:$0x1] %vm1111, 0.0
        %1126 = vst.msk [vmem:[%s1110 + $0x69] sm:$0x1] %vm1111, 0.0
        %1127 = vst.msk [vmem:[%s1110 + $0x79] sm:$0x1] %vm1111, 0.0
        %1128 = vst.msk [vmem:[%s1110 + $0x1] sm:$0xff] %vm1103, %v1095
        %1129 = vst.msk [vmem:[%s1110 + $0x11] sm:$0xff] %vm1103, %v1096
        %1130 = vst.msk [vmem:[%s1110 + $0x21] sm:$0xff] %vm1103, %v1097
        %1131 = vst.msk [vmem:[%s1110 + $0x31] sm:$0xff] %vm1103, %v1098
        %1132 = vst.msk [vmem:[%s1110 + $0x41] sm:$0xff] %vm1103, %v1099
        %1133 = vst.msk [vmem:[%s1110 + $0x51] sm:$0xff] %vm1103, %v1100
        %1134 = vst.msk [vmem:[%s1110 + $0x61] sm:$0xff] %vm1103, %v1101
        %1135 = vst.msk [vmem:[%s1110 + $0x71] sm:$0xff] %vm1103, %v1102
        %v1136 = vld [vmem:[#allocation2] sm:$0xff]
        %v1137 = vld [vmem:[#allocation2 + $0x8] sm:$0x3]
        %v1138 = vld [vmem:[#allocation2 + $0x10] sm:$0xff]
        %v1139 = vld [vmem:[#allocation2 + $0x18] sm:$0x3]
        %v1140 = vld [vmem:[#allocation2 + $0x20] sm:$0xff]
        %v1141 = vld [vmem:[#allocation2 + $0x28] sm:$0x3]
        %v1142 = vld [vmem:[#allocation2 + $0x30] sm:$0xff]
        %v1143 = vld [vmem:[#allocation2 + $0x38] sm:$0x3]
        %v1144 = vld [vmem:[#allocation2 + $0x40] sm:$0xff]
        %v1145 = vld [vmem:[#allocation2 + $0x48] sm:$0x3]
        %v1146 = vld [vmem:[#allocation2 + $0x50] sm:$0xff]
        %v1147 = vld [vmem:[#allocation2 + $0x58] sm:$0x3]
        %v1148 = vld [vmem:[#allocation2 + $0x60] sm:$0xff]
        %v1149 = vld [vmem:[#allocation2 + $0x68] sm:$0x3]
        %v1150 = vld [vmem:[#allocation2 + $0x70] sm:$0xff]
        %v1151 = vld [vmem:[#allocation2 + $0x78] sm:$0x3]
        %v1152 = vld [vmem:[#allocation2 + $0x80] sm:$0xff]
        %v1153 = vld [vmem:[#allocation2 + $0x88] sm:$0x3]
        %v1154 = vld [vmem:[#allocation2 + $0x90] sm:$0xff]
        %v1155 = vld [vmem:[#allocation2 + $0x98] sm:$0x3]
        %v1156 = vld [vmem:[%s5] sm:$0xff]
        %v1157 = vld [vmem:[%s5 + $0x8] sm:$0x1]
        %v1158 = vperm.slane %v1156, 0
        %v1159 = vmul.f32 %v1136, %v1158
        %v1160 = vmul.f32 %v1138, %v1158
        %v1161 = vmul.f32 %v1140, %v1158
        %v1162 = vmul.f32 %v1142, %v1158
        %v1163 = vmul.f32 %v1144, %v1158
        %v1164 = vmul.f32 %v1146, %v1158
        %v1165 = vmul.f32 %v1148, %v1158
        %v1166 = vmul.f32 %v1150, %v1158
        %v1167 = vadd.f32 %v1159, 0.0
        %v1168 = vadd.f32 %v1160, 0.0
        %v1169 = vadd.f32 %v1161, 0.0
        %v1170 = vadd.f32 %v1162, 0.0
        %v1171 = vadd.f32 %v1163, 0.0
        %v1172 = vadd.f32 %v1164, 0.0
        %v1173 = vadd.f32 %v1165, 0.0
        %v1174 = vadd.f32 %v1166, 0.0
        %v1175 = vperm.slane %v1156, 1
        %v1176 = vmul.f32 %v1136, %v1175
        %v1177 = vmul.f32 %v1137, %v1175
        %v1178 = vmul.f32 %v1138, %v1175
        %v1179 = vmul.f32 %v1139, %v1175
        %v1180 = vmul.f32 %v1140, %v1175
        %v1181 = vmul.f32 %v1141, %v1175
        %v1182 = vmul.f32 %v1142, %v1175
        %v1183 = vmul.f32 %v1143, %v1175
        %v1184 = vmul.f32 %v1144, %v1175
        %v1185 = vmul.f32 %v1145, %v1175
        %v1186 = vmul.f32 %v1146, %v1175
        %v1187 = vmul.f32 %v1147, %v1175
        %v1188 = vmul.f32 %v1148, %v1175
        %v1189 = vmul.f32 %v1149, %v1175
        %v1190 = vmul.f32 %v1150, %v1175
        %v1191 = vmul.f32 %v1151, %v1175
        %v1208 = vrot.slane %v1176, 1
        %v1209 = vrot.slane %v1177, 1
        %v1210 = vsel %vm539, %v1208, %v1209
        %v1211 = vrot.slane %v1178, 1
        %v1212 = vrot.slane %v1179, 1
        %v1213 = vsel %vm539, %v1211, %v1212
        %v1214 = vrot.slane %v1180, 1
        %v1215 = vrot.slane %v1181, 1
        %v1216 = vsel %vm539, %v1214, %v1215
        %v1217 = vrot.slane %v1182, 1
        %v1218 = vrot.slane %v1183, 1
        %v1219 = vsel %vm539, %v1217, %v1218
        %v1220 = vrot.slane %v1184, 1
        %v1221 = vrot.slane %v1185, 1
        %v1222 = vsel %vm539, %v1220, %v1221
        %v1223 = vrot.slane %v1186, 1
        %v1224 = vrot.slane %v1187, 1
        %v1225 = vsel %vm539, %v1223, %v1224
        %v1226 = vrot.slane %v1188, 1
        %v1227 = vrot.slane %v1189, 1
        %v1228 = vsel %vm539, %v1226, %v1227
        %v1229 = vrot.slane %v1190, 1
        %v1230 = vrot.slane %v1191, 1
        %v1231 = vsel %vm539, %v1229, %v1230
        %v1240 = vadd.f32 %v1167, %v1210
        %v1241 = vadd.f32 %v1168, %v1213
        %v1242 = vadd.f32 %v1169, %v1216
        %v1243 = vadd.f32 %v1170, %v1219
        %v1244 = vadd.f32 %v1171, %v1222
        %v1245 = vadd.f32 %v1172, %v1225
        %v1246 = vadd.f32 %v1173, %v1228
        %v1247 = vadd.f32 %v1174, %v1231
        %v1248 = vperm.slane %v1156, 2
        %v1249 = vmul.f32 %v1136, %v1248
        %v1250 = vmul.f32 %v1137, %v1248
        %v1251 = vmul.f32 %v1138, %v1248
        %v1252 = vmul.f32 %v1139, %v1248
        %v1253 = vmul.f32 %v1140, %v1248
        %v1254 = vmul.f32 %v1141, %v1248
        %v1255 = vmul.f32 %v1142, %v1248
        %v1256 = vmul.f32 %v1143, %v1248
        %v1257 = vmul.f32 %v1144, %v1248
        %v1258 = vmul.f32 %v1145, %v1248
        %v1259 = vmul.f32 %v1146, %v1248
        %v1260 = vmul.f32 %v1147, %v1248
        %v1261 = vmul.f32 %v1148, %v1248
        %v1262 = vmul.f32 %v1149, %v1248
        %v1263 = vmul.f32 %v1150, %v1248
        %v1264 = vmul.f32 %v1151, %v1248
        %vm1281 = vcmask 1045504
        %v1282 = vrot.slane %v1249, 2
        %v1283 = vrot.slane %v1250, 2
        %v1284 = vsel %vm1281, %v1282, %v1283
        %v1285 = vrot.slane %v1251, 2
        %v1286 = vrot.slane %v1252, 2
        %v1287 = vsel %vm1281, %v1285, %v1286
        %v1288 = vrot.slane %v1253, 2
        %v1289 = vrot.slane %v1254, 2
        %v1290 = vsel %vm1281, %v1288, %v1289
        %v1291 = vrot.slane %v1255, 2
        %v1292 = vrot.slane %v1256, 2
        %v1293 = vsel %vm1281, %v1291, %v1292
        %v1294 = vrot.slane %v1257, 2
        %v1295 = vrot.slane %v1258, 2
        %v1296 = vsel %vm1281, %v1294, %v1295
        %v1297 = vrot.slane %v1259, 2
        %v1298 = vrot.slane %v1260, 2
        %v1299 = vsel %vm1281, %v1297, %v1298
        %v1300 = vrot.slane %v1261, 2
        %v1301 = vrot.slane %v1262, 2
        %v1302 = vsel %vm1281, %v1300, %v1301
        %v1303 = vrot.slane %v1263, 2
        %v1304 = vrot.slane %v1264, 2
        %v1305 = vsel %vm1281, %v1303, %v1304
        %v1314 = vadd.f32 %v1240, %v1284
        %v1315 = vadd.f32 %v1241, %v1287
        %v1316 = vadd.f32 %v1242, %v1290
        %v1317 = vadd.f32 %v1243, %v1293
        %v1318 = vadd.f32 %v1244, %v1296
        %v1319 = vadd.f32 %v1245, %v1299
        %v1320 = vadd.f32 %v1246, %v1302
        %v1321 = vadd.f32 %v1247, %v1305
        %v1322 = vperm.slane %v1156, 3
        %v1323 = vmul.f32 %v1138, %v1322
        %v1324 = vmul.f32 %v1140, %v1322
        %v1325 = vmul.f32 %v1142, %v1322
        %v1326 = vmul.f32 %v1144, %v1322
        %v1327 = vmul.f32 %v1146, %v1322
        %v1328 = vmul.f32 %v1148, %v1322
        %v1329 = vmul.f32 %v1150, %v1322
        %v1330 = vmul.f32 %v1152, %v1322
        %v1331 = vadd.f32 %v1314, %v1323
        %v1332 = vadd.f32 %v1315, %v1324
        %v1333 = vadd.f32 %v1316, %v1325
        %v1334 = vadd.f32 %v1317, %v1326
        %v1335 = vadd.f32 %v1318, %v1327
        %v1336 = vadd.f32 %v1319, %v1328
        %v1337 = vadd.f32 %v1320, %v1329
        %v1338 = vadd.f32 %v1321, %v1330
        %v1339 = vperm.slane %v1156, 4
        %v1340 = vmul.f32 %v1138, %v1339
        %v1341 = vmul.f32 %v1139, %v1339
        %v1342 = vmul.f32 %v1140, %v1339
        %v1343 = vmul.f32 %v1141, %v1339
        %v1344 = vmul.f32 %v1142, %v1339
        %v1345 = vmul.f32 %v1143, %v1339
        %v1346 = vmul.f32 %v1144, %v1339
        %v1347 = vmul.f32 %v1145, %v1339
        %v1348 = vmul.f32 %v1146, %v1339
        %v1349 = vmul.f32 %v1147, %v1339
        %v1350 = vmul.f32 %v1148, %v1339
        %v1351 = vmul.f32 %v1149, %v1339
        %v1352 = vmul.f32 %v1150, %v1339
        %v1353 = vmul.f32 %v1151, %v1339
        %v1354 = vmul.f32 %v1152, %v1339
        %v1355 = vmul.f32 %v1153, %v1339
        %v1372 = vrot.slane %v1340, 1
        %v1373 = vrot.slane %v1341, 1
        %v1374 = vsel %vm539, %v1372, %v1373
        %v1375 = vrot.slane %v1342, 1
        %v1376 = vrot.slane %v1343, 1
        %v1377 = vsel %vm539, %v1375, %v1376
        %v1378 = vrot.slane %v1344, 1
        %v1379 = vrot.slane %v1345, 1
        %v1380 = vsel %vm539, %v1378, %v1379
        %v1381 = vrot.slane %v1346, 1
        %v1382 = vrot.slane %v1347, 1
        %v1383 = vsel %vm539, %v1381, %v1382
        %v1384 = vrot.slane %v1348, 1
        %v1385 = vrot.slane %v1349, 1
        %v1386 = vsel %vm539, %v1384, %v1385
        %v1387 = vrot.slane %v1350, 1
        %v1388 = vrot.slane %v1351, 1
        %v1389 = vsel %vm539, %v1387, %v1388
        %v1390 = vrot.slane %v1352, 1
        %v1391 = vrot.slane %v1353, 1
        %v1392 = vsel %vm539, %v1390, %v1391
        %v1393 = vrot.slane %v1354, 1
        %v1394 = vrot.slane %v1355, 1
        %v1395 = vsel %vm539, %v1393, %v1394
        %v1404 = vadd.f32 %v1331, %v1374
        %v1405 = vadd.f32 %v1332, %v1377
        %v1406 = vadd.f32 %v1333, %v1380
        %v1407 = vadd.f32 %v1334, %v1383
        %v1408 = vadd.f32 %v1335, %v1386
        %v1409 = vadd.f32 %v1336, %v1389
        %v1410 = vadd.f32 %v1337, %v1392
        %v1411 = vadd.f32 %v1338, %v1395
        %v1412 = vperm.slane %v1156, 5
        %v1413 = vmul.f32 %v1138, %v1412
        %v1414 = vmul.f32 %v1139, %v1412
        %v1415 = vmul.f32 %v1140, %v1412
        %v1416 = vmul.f32 %v1141, %v1412
        %v1417 = vmul.f32 %v1142, %v1412
        %v1418 = vmul.f32 %v1143, %v1412
        %v1419 = vmul.f32 %v1144, %v1412
        %v1420 = vmul.f32 %v1145, %v1412
        %v1421 = vmul.f32 %v1146, %v1412
        %v1422 = vmul.f32 %v1147, %v1412
        %v1423 = vmul.f32 %v1148, %v1412
        %v1424 = vmul.f32 %v1149, %v1412
        %v1425 = vmul.f32 %v1150, %v1412
        %v1426 = vmul.f32 %v1151, %v1412
        %v1427 = vmul.f32 %v1152, %v1412
        %v1428 = vmul.f32 %v1153, %v1412
        %v1445 = vrot.slane %v1413, 2
        %v1446 = vrot.slane %v1414, 2
        %v1447 = vsel %vm1281, %v1445, %v1446
        %v1448 = vrot.slane %v1415, 2
        %v1449 = vrot.slane %v1416, 2
        %v1450 = vsel %vm1281, %v1448, %v1449
        %v1451 = vrot.slane %v1417, 2
        %v1452 = vrot.slane %v1418, 2
        %v1453 = vsel %vm1281, %v1451, %v1452
        %v1454 = vrot.slane %v1419, 2
        %v1455 = vrot.slane %v1420, 2
        %v1456 = vsel %vm1281, %v1454, %v1455
        %v1457 = vrot.slane %v1421, 2
        %v1458 = vrot.slane %v1422, 2
        %v1459 = vsel %vm1281, %v1457, %v1458
        %v1460 = vrot.slane %v1423, 2
        %v1461 = vrot.slane %v1424, 2
        %v1462 = vsel %vm1281, %v1460, %v1461
        %v1463 = vrot.slane %v1425, 2
        %v1464 = vrot.slane %v1426, 2
        %v1465 = vsel %vm1281, %v1463, %v1464
        %v1466 = vrot.slane %v1427, 2
        %v1467 = vrot.slane %v1428, 2
        %v1468 = vsel %vm1281, %v1466, %v1467
        %v1477 = vadd.f32 %v1404, %v1447
        %v1478 = vadd.f32 %v1405, %v1450
        %v1479 = vadd.f32 %v1406, %v1453
        %v1480 = vadd.f32 %v1407, %v1456
        %v1481 = vadd.f32 %v1408, %v1459
        %v1482 = vadd.f32 %v1409, %v1462
        %v1483 = vadd.f32 %v1410, %v1465
        %v1484 = vadd.f32 %v1411, %v1468
        %v1485 = vperm.slane %v1156, 6
        %v1486 = vmul.f32 %v1140, %v1485
        %v1487 = vmul.f32 %v1142, %v1485
        %v1488 = vmul.f32 %v1144, %v1485
        %v1489 = vmul.f32 %v1146, %v1485
        %v1490 = vmul.f32 %v1148, %v1485
        %v1491 = vmul.f32 %v1150, %v1485
        %v1492 = vmul.f32 %v1152, %v1485
        %v1493 = vmul.f32 %v1154, %v1485
        %v1494 = vadd.f32 %v1477, %v1486
        %v1495 = vadd.f32 %v1478, %v1487
        %v1496 = vadd.f32 %v1479, %v1488
        %v1497 = vadd.f32 %v1480, %v1489
        %v1498 = vadd.f32 %v1481, %v1490
        %v1499 = vadd.f32 %v1482, %v1491
        %v1500 = vadd.f32 %v1483, %v1492
        %v1501 = vadd.f32 %v1484, %v1493
        %v1502 = vperm.slane %v1156, 7
        %v1503 = vmul.f32 %v1140, %v1502
        %v1504 = vmul.f32 %v1141, %v1502
        %v1505 = vmul.f32 %v1142, %v1502
        %v1506 = vmul.f32 %v1143, %v1502
        %v1507 = vmul.f32 %v1144, %v1502
        %v1508 = vmul.f32 %v1145, %v1502
        %v1509 = vmul.f32 %v1146, %v1502
        %v1510 = vmul.f32 %v1147, %v1502
        %v1511 = vmul.f32 %v1148, %v1502
        %v1512 = vmul.f32 %v1149, %v1502
        %v1513 = vmul.f32 %v1150, %v1502
        %v1514 = vmul.f32 %v1151, %v1502
        %v1515 = vmul.f32 %v1152, %v1502
        %v1516 = vmul.f32 %v1153, %v1502
        %v1517 = vmul.f32 %v1154, %v1502
        %v1518 = vmul.f32 %v1155, %v1502
        %v1535 = vrot.slane %v1503, 1
        %v1536 = vrot.slane %v1504, 1
        %v1537 = vsel %vm539, %v1535, %v1536
        %v1538 = vrot.slane %v1505, 1
        %v1539 = vrot.slane %v1506, 1
        %v1540 = vsel %vm539, %v1538, %v1539
        %v1541 = vrot.slane %v1507, 1
        %v1542 = vrot.slane %v1508, 1
        %v1543 = vsel %vm539, %v1541, %v1542
        %v1544 = vrot.slane %v1509, 1
        %v1545 = vrot.slane %v1510, 1
        %v1546 = vsel %vm539, %v1544, %v1545
        %v1547 = vrot.slane %v1511, 1
        %v1548 = vrot.slane %v1512, 1
        %v1549 = vsel %vm539, %v1547, %v1548
        %v1550 = vrot.slane %v1513, 1
        %v1551 = vrot.slane %v1514, 1
        %v1552 = vsel %vm539, %v1550, %v1551
        %v1553 = vrot.slane %v1515, 1
        %v1554 = vrot.slane %v1516, 1
        %v1555 = vsel %vm539, %v1553, %v1554
        %v1556 = vrot.slane %v1517, 1
        %v1557 = vrot.slane %v1518, 1
        %v1558 = vsel %vm539, %v1556, %v1557
        %v1567 = vadd.f32 %v1494, %v1537
        %v1568 = vadd.f32 %v1495, %v1540
        %v1569 = vadd.f32 %v1496, %v1543
        %v1570 = vadd.f32 %v1497, %v1546
        %v1571 = vadd.f32 %v1498, %v1549
        %v1572 = vadd.f32 %v1499, %v1552
        %v1573 = vadd.f32 %v1500, %v1555
        %v1574 = vadd.f32 %v1501, %v1558
        %v1575 = vperm.slane %v1157, 0
        %v1576 = vmul.f32 %v1140, %v1575
        %v1577 = vmul.f32 %v1141, %v1575
        %v1578 = vmul.f32 %v1142, %v1575
        %v1579 = vmul.f32 %v1143, %v1575
        %v1580 = vmul.f32 %v1144, %v1575
        %v1581 = vmul.f32 %v1145, %v1575
        %v1582 = vmul.f32 %v1146, %v1575
        %v1583 = vmul.f32 %v1147, %v1575
        %v1584 = vmul.f32 %v1148, %v1575
        %v1585 = vmul.f32 %v1149, %v1575
        %v1586 = vmul.f32 %v1150, %v1575
        %v1587 = vmul.f32 %v1151, %v1575
        %v1588 = vmul.f32 %v1152, %v1575
        %v1589 = vmul.f32 %v1153, %v1575
        %v1590 = vmul.f32 %v1154, %v1575
        %v1591 = vmul.f32 %v1155, %v1575
        %v1608 = vrot.slane %v1576, 2
        %v1609 = vrot.slane %v1577, 2
        %v1610 = vsel %vm1281, %v1608, %v1609
        %v1611 = vrot.slane %v1578, 2
        %v1612 = vrot.slane %v1579, 2
        %v1613 = vsel %vm1281, %v1611, %v1612
        %v1614 = vrot.slane %v1580, 2
        %v1615 = vrot.slane %v1581, 2
        %v1616 = vsel %vm1281, %v1614, %v1615
        %v1617 = vrot.slane %v1582, 2
        %v1618 = vrot.slane %v1583, 2
        %v1619 = vsel %vm1281, %v1617, %v1618
        %v1620 = vrot.slane %v1584, 2
        %v1621 = vrot.slane %v1585, 2
        %v1622 = vsel %vm1281, %v1620, %v1621
        %v1623 = vrot.slane %v1586, 2
        %v1624 = vrot.slane %v1587, 2
        %v1625 = vsel %vm1281, %v1623, %v1624
        %v1626 = vrot.slane %v1588, 2
        %v1627 = vrot.slane %v1589, 2
        %v1628 = vsel %vm1281, %v1626, %v1627
        %v1629 = vrot.slane %v1590, 2
        %v1630 = vrot.slane %v1591, 2
        %v1631 = vsel %vm1281, %v1629, %v1630
        %v1640 = vadd.f32 %v1567, %v1610
        %v1641 = vadd.f32 %v1568, %v1613
        %v1642 = vadd.f32 %v1569, %v1616
        %v1643 = vadd.f32 %v1570, %v1619
        %v1644 = vadd.f32 %v1571, %v1622
        %v1645 = vadd.f32 %v1572, %v1625
        %v1646 = vadd.f32 %v1573, %v1628
        %v1647 = vadd.f32 %v1574, %v1631
        %v1648 = vld [vmem:[%s6] sm:$0x1]
        %v1650 = vperm.slane %v1648, 0
        %v1652 = vadd.f32 %v1640, %v1650
        %v1653 = vadd.f32 %v1641, %v1650
        %v1654 = vadd.f32 %v1642, %v1650
        %v1655 = vadd.f32 %v1643, %v1650
        %v1656 = vadd.f32 %v1644, %v1650
        %v1657 = vadd.f32 %v1645, %v1650
        %v1658 = vadd.f32 %v1646, %v1650
        %v1659 = vadd.f32 %v1647, %v1650
        %v1660 = vmax.f32 %v1652, 0.0
        %v1661 = vmax.f32 %v1653, 0.0
        %v1662 = vmax.f32 %v1654, 0.0
        %v1663 = vmax.f32 %v1655, 0.0
        %v1664 = vmax.f32 %v1656, 0.0
        %v1665 = vmax.f32 %v1657, 0.0
        %v1666 = vmax.f32 %v1658, 0.0
        %v1667 = vmax.f32 %v1659, 0.0
        %v1668 = vmin.f32 %v1660, 6.0
        %v1669 = vmin.f32 %v1661, 6.0
        %v1670 = vmin.f32 %v1662, 6.0
        %v1671 = vmin.f32 %v1663, 6.0
        %v1672 = vmin.f32 %v1664, 6.0
        %v1673 = vmin.f32 %v1665, 6.0
        %v1674 = vmin.f32 %v1666, 6.0
        %v1675 = vmin.f32 %v1667, 6.0
        %v1676 = vpack.c.bf16 %v1669, %v1668
        %v1677 = vpack.c.bf16 %v1671, %v1670
        %v1678 = vpack.c.bf16 %v1673, %v1672
        %v1679 = vpack.c.bf16 %v1675, %v1674
        %v1680 = vld [vmem:[%s7] sm:$0xf]
        %v1681 = vld [vmem:[%s7 + $0x4] sm:$0xf]
        %v1682 = vld [vmem:[%s7 + $0x8] sm:$0xf]
        %v1683 = vld [vmem:[%s7 + $0xc] sm:$0xf]
        %v1684 = vld [vmem:[%s8] sm:$0x1]
        %v1686 = vperm.slane %v1684, 0
        %v1692 = vunpack.c.l.b16 %v1680
        %v1693 = vunpack.c.l.b16 %v1681
        %v1694 = vunpack.c.l.b16 %v1682
        %v1695 = vunpack.c.l.b16 %v1683
        %v1696 = vpack.c.b16 %v1693, %v1692
        %v1697 = vpack.c.b16 %v1695, %v1694
        %v1701 = vsel %vm1103, %v1676, 0
        %v1704 = vsel %vm1103, %v1677, 0
        %v1707 = vsel %vm1103, %v1678, 0
        %v1710 = vsel %vm1103, %v1679, 0
        %1712 = vmatpush.bf16.msra.mxu0 0
        %1713 = vmatpush.bf16.msra.mxu0 0
        %1714 = vmatpush.bf16.msra.mxu0 0
        %1715 = vmatpush.bf16.msra.mxu0 0
        %1716 = vmatpush.bf16.msra.mxu0 0
        %1717 = vmatpush.bf16.msra.mxu0 0
        %1718 = vmatpush.bf16.msra.mxu0 %v1697
        %1719 = vmatpush.bf16.msra.mxu0 %v1696
        %1720 = vmatmul.bf16.gmra.mxu0 %v1701
        %v1721 = vpop.f32.mrf.mxu0
        %v1722 = vadd.f32 %v1686, %v1721
        %v1723 = vpop.f32.mrf.mxu0
        %v1724 = vadd.f32 %v1686, %v1723
        %1725 = vmatmul.bf16.gmra.mxu0 %v1704
        %v1726 = vpop.f32.mrf.mxu0
        %v1727 = vadd.f32 %v1686, %v1726
        %v1728 = vpop.f32.mrf.mxu0
        %v1729 = vadd.f32 %v1686, %v1728
        %1730 = vmatmul.bf16.gmra.mxu0 %v1707
        %v1731 = vpop.f32.mrf.mxu0
        %v1732 = vadd.f32 %v1686, %v1731
        %v1733 = vpop.f32.mrf.mxu0
        %v1734 = vadd.f32 %v1686, %v1733
        %1735 = vmatmul.bf16.gmra.mxu0 %v1710
        %v1736 = vpop.f32.mrf.mxu0
        %v1737 = vadd.f32 %v1686, %v1736
        %v1738 = vpop.f32.mrf.mxu0
        %v1739 = vadd.f32 %v1686, %v1738
        %1740 = vdwg.mxu0
        %v1741 = vadd.f32 %v1722, %v1021
        %v1742 = vadd.f32 %v1724, %v1022
        %v1743 = vadd.f32 %v1727, %v1023
        %v1744 = vadd.f32 %v1729, %v1024
        %v1745 = vadd.f32 %v1732, %v1025
        %v1746 = vadd.f32 %v1734, %v1026
        %v1747 = vadd.f32 %v1737, %v1027
        %v1748 = vadd.f32 %v1739, %v1028
        %v1749 = vsel %vm1045, %v1741, 0.0
        %v1750 = vsel %vm1045, %v1742, 0.0
        %v1751 = vadd.f32 %v1749, %v1750
        %v1752 = vsel %vm1045, %v1743, 0.0
        %v1753 = vadd.f32 %v1751, %v1752
        %v1754 = vsel %vm1045, %v1744, 0.0
        %v1755 = vadd.f32 %v1753, %v1754
        %v1756 = vsel %vm1045, %v1745, 0.0
        %v1757 = vadd.f32 %v1755, %v1756
        %v1758 = vsel %vm1045, %v1746, 0.0
        %v1759 = vadd.f32 %v1757, %v1758
        %v1760 = vsel %vm1045, %v1747, 0.0
        %v1761 = vadd.f32 %v1759, %v1760
        %v1762 = vsel %vm1045, %v1748, 0.0
        %v1763 = vadd.f32 %v1761, %v1762
        %v1764 = vrot.slane %v1763, 4
        %v1765 = vadd.f32 %v1763, %v1764
        %v1766 = vrot.slane %v1765, 2
        %v1767 = vadd.f32 %v1765, %v1766
        %v1768 = vrot.slane %v1767, 1
        %v1769 = vadd.f32 %v1767, %v1768
        %v1770 = vrcp.pop 64.0
        %v1771 = vmul.f32 64.0, %v1770
        %v1772 = vsub.f32 1.0, %v1771
        %v1773 = vmul.f32 %v1770, %v1772
        %v1774 = vadd.f32 %v1770, %v1773
        %vm1775 = vweird.f32 %v1770
        %v1776 = vsel %vm1775, %v1770, %v1774
        %v1777 = vmul.f32 %v1769, %v1776
        %v1778 = vpack.c.bf16 %v1777, %v1777
        %v1779 = vld [vmem:[%s9] sm:$0xf]
        %v1780 = vld [vmem:[%s9 + $0x4] sm:$0xf]
        %v1781 = vld [vmem:[%s10] sm:$0x1]
        %v1784 = vunpack.c.l.b16 %v1779
        %v1785 = vunpack.c.l.b16 %v1780
        %v1786 = vpack.c.b16 %v1785, %v1784
        %v1789 = vsel %vm1045, %v1778, 0
        %1791 = vmatpush.bf16.msra.mxu0 0
        %1792 = vmatpush.bf16.msra.mxu0 0
        %1793 = vmatpush.bf16.msra.mxu0 0
        %1794 = vmatpush.bf16.msra.mxu0 0
        %1795 = vmatpush.bf16.msra.mxu0 0
        %1796 = vmatpush.bf16.msra.mxu0 0
        %1797 = vmatpush.bf16.msra.mxu0 0
        %1798 = vmatpush.bf16.msra.mxu0 %v1786
        %1799 = vmatmul.bf16.gmra.mxu0 %v1789
        %v1800 = vpop.f32.mrf.mxu0
        %v1801 = vadd.f32 %v1781, %v1800
        %v1802 = vpop.f32.mrf.mxu0
        %1803 = vdwg.mxu0
        %1804 = vst [vmem:[%s378] sm:$0x1] %v1801
        %s1805 = sand.u32 %s269, 1
        %s1806 = scalar_lea.sflag [#allocation4], %s1805
        %s1807 = sand.u32 %s269, 1
        %s1808 = scalar_lea.vmem [#allocation3], %s1807
        // Predicated region
        $region65: #{trick_model_forward.1} parent=63 // pred_check
          %p1809 = pneg %p279
        $region66: #{trick_model_forward.1} parent=63 // pred_check_branch
          %1811 = sbr.rel (%p1809) target = $region68
        $region67: #{trick_model_forward.1} parent=63 // pred_region
          %1813 = vsyncadd %s1806, 0
          %s1814 = scalar_lea.hbm %s11, %s25
          %s1816 = sshll.u32 %s1808, 4
          %s1817 = int_to_ptr.vmem [resolvable:$true] %s1816
          %s1818 = sshll.u32 %s1814, 4
          %s1819 = int_to_ptr.hbm [resolvable:$true] %s1818
          %1821 = dma.vmem_to_hbm [thread:$0]  %s1817, 16, %s1819, %s1806
        $region68: #{trick_model_forward.1} parent=63 // pred_fallthru
          _
      $region64: #{trick_model_forward.1} parent=5 // pred_fallthru
        _
      %p1822 = scmp.le.s32.totalorder 2, %s20
      // Predicated region
      $region69: #{trick_model_forward.1} parent=5 // pred_check
        %p1823 = pneg %p1822
      $region70: #{trick_model_forward.1} parent=5 // pred_check_branch
        %1825 = sbr.rel (%p1823) target = $region72
      $region71: #{trick_model_forward.1} parent=5 // pred_region
        %s1826 = ssub.s32 %s20, 2
        // Predicated region
        $region73: #{trick_model_forward.1} parent=71 // pred_check
          %p1827 = pneg %p285
        $region74: #{trick_model_forward.1} parent=71 // pred_check_branch
          %1829 = sbr.rel (%p1827) target = $region76
        $region75: #{trick_model_forward.1} parent=71 // pred_region
          %s1830 = sand.u32 %s270, 1
          %s1831 = scalar_lea.sflag [#allocation4], %s1830
          %s1832 = sand.u32 %s270, 1
          %s1833 = scalar_lea.vmem [#allocation3], %s1832
          %1835 = dma.done %s1831, 16
        $region76: #{trick_model_forward.1} parent=71 // pred_fallthru
          _
      $region72: #{trick_model_forward.1} parent=5 // pred_fallthru
        _
    $region6: #{trick_model_forward.1} parent=1 // loop_footer
      %s24 = sadd.s32 1, %s20
    $region7: #{trick_model_forward.1} parent=1 // loop_footer_branch
      %19 = sbr.rel target = $region3
    $region8: #{trick_model_forward.1} parent=1 // loop_exit
      _
    %1836 = vsyncpa [#allocation4], 1
    %s1837 = scalar_lea.sflag [#allocation4], 1
    %1838 = vsyncpa %s1837, 1

</llo_original>
